<compile_context>
chip_gen: v7x
topology: tpu7x:2x2x1
jax: 0.10.0
libtpu: 0.0.40
codegen_flags: <defaults>
</compile_context>

<pallas_src>
import functools

import jax
import jax.numpy as jnp
from jax import lax
from jax.experimental import pallas as pl
from jax.experimental.pallas import tpu as pltpu

# ---------------- small synthetic WaveNet configuration ----------------
OUT_CHANNELS = 32       # quantization classes
LAYERS = 4
STACKS = 2
RESIDUAL_CHANNELS = 16
GATE_CHANNELS = 32
SKIP_CHANNELS = 16
KERNEL_SIZE = 2         # causal dilated conv taps
CIN_CHANNELS = 8
UPSAMPLE_SCALES = (2, 2)
AUX_CONTEXT_WINDOW = 0  # -> conv_in is a 1x1 conv

LAYERS_PER_STACK = LAYERS // STACKS
DILATIONS = tuple(2 ** (l % LAYERS_PER_STACK) for l in range(LAYERS))
GATE_HALF = GATE_CHANNELS // 2

TIME_TILE = 128         # lanes per time tile; bump to 512-2048 for long T


# ---------------- Pallas kernel ----------------
def wavenet_kernel(x_ref, c_ref,
                   wfirst_ref, bfirst_ref,
                   wgate_ref, bgate_ref, wsr_ref, bsr_ref,
                   wl1_ref, bl1_ref, wl2_ref, bl2_ref,
                   out_ref, carry_ref, *,
                   dilations, gate_half, skip_channels):
    f32 = jnp.float32
    t_tile = pl.program_id(1)
    TT = out_ref.shape[-1]
    Q = wfirst_ref.shape[-1]

    # Reset the per-layer causal history at the first time tile of each batch.
    @pl.when(t_tile == 0)
    def _():
        carry_ref[...] = jnp.zeros_like(carry_ref)

    # ---- first 1x1 conv via in-kernel one-hot (no HBM one-hot stream) ----
    x_idx = x_ref[0]                                           # (1, TT) int32
    q_iota = lax.broadcasted_iota(jnp.int32, (Q, TT), 0)
    onehot = (q_iota == x_idx).astype(f32)                     # (Q, TT)
    h = jnp.dot(wfirst_ref[...], onehot,
                preferred_element_type=f32) + bfirst_ref[...]  # (R, TT)

    c = c_ref[0]                                               # (Cc, TT)
    R = h.shape[0]
    skips = jnp.zeros((skip_channels, TT), f32)

    # Hoisted causal masks (one per distinct dilation; time is on lanes).
    col = lax.broadcasted_iota(jnp.int32, (1, TT), 1)
    masks = {d: jnp.broadcast_to(col >= d, (R, TT)) for d in sorted(set(dilations))}

    # NOTE: static unroll is fine at LAYERS=4; switch to lax.fori_loop with an
    # SMEM dilation table for deep (24-30 layer) configs to bound vreg pressure.
    for l, d in enumerate(dilations):
        prev_h = carry_ref[l]      # layer-l input h from the previous time tile
        carry_ref[l] = h           # save current layer-l input for the next tile

        # causal dilated tap: h_shift[t] = h[t-d], pulling the previous tile's
        # tail (or zeros on the very first tile) for t < d.
        h_shift = jnp.where(masks[d],
                            pltpu.roll(h, d, axis=1),
                            pltpu.roll(prev_h, d, axis=1))

        # fused gate matmul: [a|b] = W_gate @ [h ; h_shift ; c] + b_gate
        hcat = jnp.concatenate([h, h_shift, c], axis=0)        # (2R+Cc, TT)
        z = jnp.dot(wgate_ref[l], hcat,
                    preferred_element_type=f32) + bgate_ref[l]  # (2*Gh, TT)
        g = jnp.tanh(z[:gate_half]) * jax.nn.sigmoid(z[gate_half:])

        # fused skip + residual projection
        sr = jnp.dot(wsr_ref[l], g,
                     preferred_element_type=f32) + bsr_ref[l]   # (S+R, TT)
        skips = skips + sr[:skip_channels]
        h = sr[skip_channels:] + h

    # last_conv_layers: ReLU -> 1x1 -> ReLU -> 1x1
    y = jnp.maximum(skips, 0.0)
    y = jnp.dot(wl1_ref[...], y, preferred_element_type=f32) + bl1_ref[...]
    y = jnp.maximum(y, 0.0)
    y = jnp.dot(wl2_ref[...], y, preferred_element_type=f32) + bl2_ref[...]
    out_ref[0] = y                                             # (Q, TT), lane-dense


# ---------------- plain-JAX glue: ConvInUpsampleNetwork ----------------
def upsample_net(c, w_conv_in):
    """c: (B, Cc, Tc)  ->  (B, Cc, Tc * prod(UPSAMPLE_SCALES)), channel-first."""
    # conv_in: kernel_size = 2*aux_context_window + 1 = 1, bias=False
    c = jnp.einsum('oi,bit->bot', w_conv_in, c)
    for s in UPSAMPLE_SCALES:
        c = jnp.repeat(c, s, axis=-1)                 # nearest-neighbor upsample in time
        k = 2 * s + 1
        cp = jnp.pad(c, ((0, 0), (0, 0), (s, s)))
        T = c.shape[-1]
        c = sum(cp[..., j:j + T] for j in range(k)) / k   # uniform smoothing conv
    return c


# ---------------- weight packing (channel-first, fused) ----------------
def pack_params(p):
    t = lambda a: jnp.transpose(a, (0, 2, 1))
    # gate: columns ordered [h | h_shift | c]; rows ordered [tanh "a" | sigmoid "b"]
    wgate = jnp.concatenate([
        jnp.concatenate([t(p["w1a"]), t(p["w0a"]), t(p["wca"])], axis=2),
        jnp.concatenate([t(p["w1b"]), t(p["w0b"]), t(p["wcb"])], axis=2),
    ], axis=1)                                                    # (L, 2Gh, 2R+Cc)
    bgate = jnp.concatenate([t(p["ba"]), t(p["bb"])], axis=1)     # (L, 2Gh, 1)
    # skip / residual: rows ordered [skip | residual]
    wsr = jnp.concatenate([t(p["wskip"]), t(p["wout"])], axis=1)  # (L, S+R, Gh)
    bsr = jnp.concatenate([t(p["bskip"]), t(p["bout"])], axis=1)  # (L, S+R, 1)
    return dict(
        w_first=p["w_first"].T, b_first=p["b_first"].T,           # (R, Q), (R, 1)
        wgate=wgate, bgate=bgate, wsr=wsr, bsr=bsr,
        wl1=p["wl1"].T, bl1=p["bl1"].T,                           # (S, S), (S, 1)
        wl2=p["wl2"].T, bl2=p["bl2"].T,                           # (Q, S), (Q, 1)
    )


# ---------------- wrapper ----------------
def wavenet_forward(x_idx, c, params):
    """x_idx: (B, T) int32 quantized waveform; c: (B, cin_channels, T_c).

    Returns (B, out_channels, T) to match the PyTorch module (no transposes).
    """
    c_up = upsample_net(c, params["w_conv_in"])          # (B, Cc, T) channel-first
    B, Cc, T = c_up.shape
    assert x_idx.shape == (B, T)

    TT = TIME_TILE if T % TIME_TILE == 0 else T
    NT = T // TT

    x3 = x_idx.astype(jnp.int32).reshape(B, 1, T)        # int indices, 4 B/sample

    packed = pack_params(params)
    names = ("w_first", "b_first", "wgate", "bgate", "wsr", "bsr",
             "wl1", "bl1", "wl2", "bl2")
    weight_arrays = [packed[k] for k in names]

    def full_spec(w):
        nd = w.ndim
        return pl.BlockSpec(w.shape, lambda b, t, _nd=nd: (0,) * _nd)

    in_specs = [
        pl.BlockSpec((1, 1, TT), lambda b, t: (b, 0, t)),
        pl.BlockSpec((1, Cc, TT), lambda b, t: (b, 0, t)),
    ] + [full_spec(w) for w in weight_arrays]

    out = pl.pallas_call(
        functools.partial(wavenet_kernel, dilations=DILATIONS,
                          gate_half=GATE_HALF, skip_channels=SKIP_CHANNELS),
        out_shape=jax.ShapeDtypeStruct((B, OUT_CHANNELS, T), jnp.float32),
        grid=(B, NT),
        in_specs=in_specs,
        out_specs=pl.BlockSpec((1, OUT_CHANNELS, TT), lambda b, t: (b, 0, t)),
        scratch_shapes=[pltpu.VMEM((LAYERS, RESIDUAL_CHANNELS, TT), jnp.float32)],
        compiler_params=pltpu.CompilerParams(
            dimension_semantics=("parallel", "arbitrary")),
    )(x3, c_up, *weight_arrays)

    return out   # (B, out_channels, T)


# ---------------- deterministic parameter init ----------------
def make_params():
    keys = jax.random.split(jax.random.PRNGKey(0), 19)
    ki = iter(keys)

    def w(shape, fan_in, scale=1.0):
        return scale * jax.random.normal(next(ki), shape, dtype=jnp.float32) / jnp.sqrt(
            jnp.float32(fan_in))

    L, R, Gh, S, Q, Cc = (LAYERS, RESIDUAL_CHANNELS, GATE_HALF,
                          SKIP_CHANNELS, OUT_CHANNELS, CIN_CHANNELS)
    p = {}
    p["w_conv_in"] = w((Cc, Cc), Cc)                      # conv_in (1x1, no bias)
    p["w_first"] = w((Q, R), Q)
    p["b_first"] = w((1, R), 1, 0.1)
    # dilated conv (kernel_size=2), output split into tanh ("a") / sigmoid ("b") halves
    p["w0a"] = w((L, R, Gh), R * KERNEL_SIZE)
    p["w0b"] = w((L, R, Gh), R * KERNEL_SIZE)
    p["w1a"] = w((L, R, Gh), R * KERNEL_SIZE)
    p["w1b"] = w((L, R, Gh), R * KERNEL_SIZE)
    p["ba"] = w((L, 1, Gh), 1, 0.1)
    p["bb"] = w((L, 1, Gh), 1, 0.1)
    # local conditioning 1x1 conv (bias=False in the PyTorch module)
    p["wca"] = w((L, Cc, Gh), Cc)
    p["wcb"] = w((L, Cc, Gh), Cc)
    # residual / skip 1x1 convs
    p["wout"] = w((L, Gh, R), Gh)
    p["bout"] = w((L, 1, R), 1, 0.1)
    p["wskip"] = w((L, Gh, S), Gh)
    p["bskip"] = w((L, 1, S), 1, 0.1)
    # last conv layers
    p["wl1"] = w((S, S), S)
    p["bl1"] = w((1, S), 1, 0.1)
    p["wl2"] = w((S, Q), S)
    p["bl2"] = w((1, Q), 1, 0.1)
    return p


# ---------------- plain-JAX reference (same math, for sanity check) ----------------
def reference_forward(x_idx, c, p):
    x = jax.nn.one_hot(x_idx, OUT_CHANNELS, dtype=jnp.float32)       # (B, T, Q)
    cu = jnp.transpose(upsample_net(c, p["w_conv_in"]), (0, 2, 1))   # (B, T, Cc)
    T = x.shape[1]
    h = x @ p["w_first"] + p["b_first"]
    skips = 0.0
    for l, d in enumerate(DILATIONS):
        h_shift = jnp.pad(h, ((0, 0), (d, 0), (0, 0)))[:, :T, :]
        a = h_shift @ p["w0a"][l] + h @ p["w1a"][l] + p["ba"][l] + cu @ p["wca"][l]
        b = h_shift @ p["w0b"][l] + h @ p["w1b"][l] + p["bb"][l] + cu @ p["wcb"][l]
        g = jnp.tanh(a) * jax.nn.sigmoid(b)
        skips = skips + g @ p["wskip"][l] + p["bskip"][l]
        h = g @ p["wout"][l] + p["bout"][l] + h
    y = jnp.maximum(skips, 0.0)
    y = y @ p["wl1"] + p["bl1"]
    y = jnp.maximum(y, 0.0)
    y = y @ p["wl2"] + p["bl2"]
    return jnp.transpose(y, (0, 2, 1))   # (B, out_channels, T)


# TODO(synk): autoregressive inference() (OneHotCategorical sampling loop) is not
# part of forward() and is not implemented here.

if __name__ == "__main__":
    params = make_params()

    B = 2
    T_c = 64
    up = 1
    for s in UPSAMPLE_SCALES:
        up *= s
    T = T_c * up   # 256 -> two 128-sample time tiles (exercises the causal carry)

    kx, kc = jax.random.split(jax.random.PRNGKey(0), 2)
    x_idx = jax.random.randint(kx, (B, T), 0, OUT_CHANNELS, dtype=jnp.int32)
    c = jax.random.normal(kc, (B, CIN_CHANNELS, T_c), dtype=jnp.float32)

    out = wavenet_forward(x_idx, c, params)
    out = jax.block_until_ready(out)

    assert out.shape == (B, OUT_CHANNELS, T), out.shape

    ref = reference_forward(x_idx, c, params)
    assert jnp.allclose(out, ref, rtol=1e-2, atol=1e-2), float(jnp.max(jnp.abs(out - ref)))

    print("KERNEL_OK")
</pallas_src>

<mosaic_0001>
module attributes {stable_mosaic.version = 11 : i64} {
  func.func @wavenet_kernel(%arg0: i32, %arg1: i32, %arg2: memref<1x1x128xi32, #tpu.memory_space<vmem>>, %arg3: memref<1x8x128xf32, #tpu.memory_space<vmem>>, %arg4: memref<16x32xf32, #tpu.memory_space<vmem>>, %arg5: memref<16x1xf32, #tpu.memory_space<vmem>>, %arg6: memref<4x32x40xf32, #tpu.memory_space<vmem>>, %arg7: memref<4x32x1xf32, #tpu.memory_space<vmem>>, %arg8: memref<4x32x16xf32, #tpu.memory_space<vmem>>, %arg9: memref<4x32x1xf32, #tpu.memory_space<vmem>>, %arg10: memref<16x16xf32, #tpu.memory_space<vmem>>, %arg11: memref<16x1xf32, #tpu.memory_space<vmem>>, %arg12: memref<32x16xf32, #tpu.memory_space<vmem>>, %arg13: memref<32x1xf32, #tpu.memory_space<vmem>>, %arg14: memref<1x32x128xf32, #tpu.memory_space<vmem>>, %arg15: memref<4x16x128xf32, #tpu.memory_space<vmem>>) attributes {dimension_semantics = [#tpu.dimension_semantics<parallel>, #tpu.dimension_semantics<arbitrary>], iteration_bounds = array<i64: 2, 2>, scalar_prefetch = 0 : i64, scratch_operands = 1 : i64, tpu.core_type = #tpu.core_type<tc>, window_params = [{transform_indices = @transform_0, window_bounds = array<i64: 1, 1, 128>}, {transform_indices = @transform_1, window_bounds = array<i64: 1, 8, 128>}, {pipeline_mode = #tpu.pipeline_mode<synchronous>, transform_indices = @transform_2, window_bounds = array<i64: 16, 32>}, {pipeline_mode = #tpu.pipeline_mode<synchronous>, transform_indices = @transform_3, window_bounds = array<i64: 16, 1>}, {pipeline_mode = #tpu.pipeline_mode<synchronous>, transform_indices = @transform_4, window_bounds = array<i64: 4, 32, 40>}, {pipeline_mode = #tpu.pipeline_mode<synchronous>, transform_indices = @transform_5, window_bounds = array<i64: 4, 32, 1>}, {pipeline_mode = #tpu.pipeline_mode<synchronous>, transform_indices = @transform_6, window_bounds = array<i64: 4, 32, 16>}, {pipeline_mode = #tpu.pipeline_mode<synchronous>, transform_indices = @transform_7, window_bounds = array<i64: 4, 32, 1>}, {pipeline_mode = #tpu.pipeline_mode<synchronous>, transform_indices = @transform_8, window_bounds = array<i64: 16, 16>}, {pipeline_mode = #tpu.pipeline_mode<synchronous>, transform_indices = @transform_9, window_bounds = array<i64: 16, 1>}, {pipeline_mode = #tpu.pipeline_mode<synchronous>, transform_indices = @transform_10, window_bounds = array<i64: 32, 16>}, {pipeline_mode = #tpu.pipeline_mode<synchronous>, transform_indices = @transform_11, window_bounds = array<i64: 32, 1>}, {transform_indices = @transform_12, window_bounds = array<i64: 1, 32, 128>}]} {
    %c0_i32 = arith.constant 0 : i32
    %0 = arith.cmpi eq, %arg1, %c0_i32 : i32
    %1 = arith.extui %0 : i1 to i32
    %c0_i32_0 = arith.constant 0 : i32
    %2 = arith.cmpi ne, %1, %c0_i32_0 : i32
    scf.if %2 {
      %cst_115 = arith.constant 0.000000e+00 : f32
      %186 = vector.broadcast %cst_115 : f32 to vector<4x16x128xf32>
      %c0_116 = arith.constant 0 : index
      %c0_117 = arith.constant 0 : index
      %c0_118 = arith.constant 0 : index
      %187 = vector.load %arg15[%c0_116, %c0_117, %c0_118] : memref<4x16x128xf32, #tpu.memory_space<vmem>>, vector<4x16x128xf32>
      tpu.vector_store %arg15[%c0_116, %c0_117, %c0_118], %186 {strides = array<i32>} : memref<4x16x128xf32, #tpu.memory_space<vmem>>, vector<4x16x128xf32>,
    } else {
    }
    %c0 = arith.constant 0 : index
    %c0_1 = arith.constant 0 : index
    %c0_2 = arith.constant 0 : index
    %3 = vector.load %arg2[%c0, %c0_1, %c0_2] : memref<1x1x128xi32, #tpu.memory_space<vmem>>, vector<1x1x128xi32>
    %4 = vector.shape_cast %3 : vector<1x1x128xi32> to vector<1x128xi32>
    %5 = tpu.iota {dimensions = array<i32: 0>} : vector<32x128xi32>
    %6 = vector.broadcast %4 : vector<1x128xi32> to vector<32x128xi32>
    %7 = arith.cmpi eq, %5, %6 : vector<32x128xi32>
    %8 = arith.extui %7 : vector<32x128xi1> to vector<32x128xi32>
    %9 = arith.sitofp %8 : vector<32x128xi32> to vector<32x128xf32>
    %c0_3 = arith.constant 0 : index
    %c0_4 = arith.constant 0 : index
    %10 = vector.load %arg4[%c0_3, %c0_4] : memref<16x32xf32, #tpu.memory_space<vmem>>, vector<16x32xf32>
    %cst = arith.constant dense<0.000000e+00> : vector<16x128xf32>
    %11 = tpu.matmul %10, %9, %cst {dimension_numbers = #tpu.dot_dimension_numbers<[1], [0], [0], [1], [0, 0, 1, 1], [], []>} : vector<16x32xf32>, vector<32x128xf32>, vector<16x128xf32> -> vector<16x128xf32>
    %c0_5 = arith.constant 0 : index
    %c0_6 = arith.constant 0 : index
    %12 = vector.load %arg5[%c0_5, %c0_6] : memref<16x1xf32, #tpu.memory_space<vmem>>, vector<16x1xf32>
    %13 = vector.broadcast %12 : vector<16x1xf32> to vector<16x128xf32>
    %14 = arith.addf %11, %13 : vector<16x128xf32>
    %c0_7 = arith.constant 0 : index
    %c0_8 = arith.constant 0 : index
    %c0_9 = arith.constant 0 : index
    %15 = vector.load %arg3[%c0_7, %c0_8, %c0_9] : memref<1x8x128xf32, #tpu.memory_space<vmem>>, vector<1x8x128xf32>
    %16 = vector.shape_cast %15 : vector<1x8x128xf32> to vector<8x128xf32>
    %cst_10 = arith.constant 0.000000e+00 : f32
    %17 = vector.broadcast %cst_10 : f32 to vector<16x128xf32>
    %18 = tpu.iota {dimensions = array<i32: 1>} : vector<1x128xi32>
    %c1_i32 = arith.constant 1 : i32
    %19 = vector.broadcast %c1_i32 : i32 to vector<1x128xi32>
    %20 = arith.cmpi sge, %18, %19 : vector<1x128xi32>
    %21 = vector.shape_cast %20 : vector<1x128xi1> to vector<1x128xi1>
    %22 = vector.broadcast %21 : vector<1x128xi1> to vector<16x128xi1>
    %c2_i32 = arith.constant 2 : i32
    %23 = vector.broadcast %c2_i32 : i32 to vector<1x128xi32>
    %24 = arith.cmpi sge, %18, %23 : vector<1x128xi32>
    %25 = vector.shape_cast %24 : vector<1x128xi1> to vector<1x128xi1>
    %26 = vector.broadcast %25 : vector<1x128xi1> to vector<16x128xi1>
    %c0_11 = arith.constant 0 : index
    %c0_12 = arith.constant 0 : index
    %c0_13 = arith.constant 0 : index
    %27 = vector.load %arg15[%c0_11, %c0_12, %c0_13] : memref<4x16x128xf32, #tpu.memory_space<vmem>>, vector<1x16x128xf32>
    %28 = vector.shape_cast %27 : vector<1x16x128xf32> to vector<16x128xf32>
    %c0_14 = arith.constant 0 : index
    %c0_15 = arith.constant 0 : index
    %c0_16 = arith.constant 0 : index
    %29 = vector.load %arg15[%c0_14, %c0_15, %c0_16] : memref<4x16x128xf32, #tpu.memory_space<vmem>>, vector<1x16x128xf32>
    %30 = vector.shape_cast %29 : vector<1x16x128xf32> to vector<16x128xf32>
    %31 = vector.shape_cast %14 : vector<16x128xf32> to vector<1x16x128xf32>
    tpu.vector_store %arg15[%c0_14, %c0_15, %c0_16], %31 {strides = array<i32>} : memref<4x16x128xf32, #tpu.memory_space<vmem>>, vector<1x16x128xf32>,
    %c1_i32_17 = arith.constant 1 : i32
    %32 = tpu.dynamic_rotate %14 by %c1_i32_17 dim 1 : vector<16x128xf32>, i32 -> vector<16x128xf32>
    %c1_i32_18 = arith.constant 1 : i32
    %33 = tpu.dynamic_rotate %28 by %c1_i32_18 dim 1 : vector<16x128xf32>, i32 -> vector<16x128xf32>
    %34 = arith.select %22, %32, %33 : vector<16x128xi1>, vector<16x128xf32>
    %35 = tpu.concatenate %14, %34, %16 in 0 : vector<16x128xf32>, vector<16x128xf32>, vector<8x128xf32> -> vector<40x128xf32>
    %c0_19 = arith.constant 0 : index
    %c0_20 = arith.constant 0 : index
    %c0_21 = arith.constant 0 : index
    %36 = vector.load %arg6[%c0_19, %c0_20, %c0_21] : memref<4x32x40xf32, #tpu.memory_space<vmem>>, vector<1x32x40xf32>
    %37 = vector.shape_cast %36 : vector<1x32x40xf32> to vector<32x40xf32>
    %cst_22 = arith.constant dense<0.000000e+00> : vector<32x128xf32>
    %38 = tpu.matmul %37, %35, %cst_22 {dimension_numbers = #tpu.dot_dimension_numbers<[1], [0], [0], [1], [0, 0, 1, 1], [], []>} : vector<32x40xf32>, vector<40x128xf32>, vector<32x128xf32> -> vector<32x128xf32>
    %c0_23 = arith.constant 0 : index
    %c0_24 = arith.constant 0 : index
    %c0_25 = arith.constant 0 : index
    %39 = vector.load %arg7[%c0_23, %c0_24, %c0_25] : memref<4x32x1xf32, #tpu.memory_space<vmem>>, vector<1x32x1xf32>
    %40 = vector.shape_cast %39 : vector<1x32x1xf32> to vector<32x1xf32>
    %41 = vector.broadcast %40 : vector<32x1xf32> to vector<32x128xf32>
    %42 = arith.addf %38, %41 : vector<32x128xf32>
    %43 = vector.extract_strided_slice %42 {offsets = [0, 0], sizes = [16, 128], strides = [1, 1]} : vector<32x128xf32> to vector<16x128xf32>
    %44 = math.tanh %43 : vector<16x128xf32>
    %45 = vector.extract_strided_slice %42 {offsets = [16, 0], sizes = [16, 128], strides = [1, 1]} : vector<32x128xf32> to vector<16x128xf32>
    %46 = arith.negf %45 : vector<16x128xf32>
    %47 = math.exp %46 : vector<16x128xf32>
    %cst_26 = arith.constant 1.000000e+00 : f32
    %48 = vector.broadcast %cst_26 : f32 to vector<16x128xf32>
    %49 = arith.addf %48, %47 : vector<16x128xf32>
    %50 = arith.divf %48, %49 : vector<16x128xf32>
    %51 = arith.mulf %44, %50 : vector<16x128xf32>
    %c0_27 = arith.constant 0 : index
    %c0_28 = arith.constant 0 : index
    %c0_29 = arith.constant 0 : index
    %52 = vector.load %arg8[%c0_27, %c0_28, %c0_29] : memref<4x32x16xf32, #tpu.memory_space<vmem>>, vector<1x32x16xf32>
    %53 = vector.shape_cast %52 : vector<1x32x16xf32> to vector<32x16xf32>
    %cst_30 = arith.constant dense<0.000000e+00> : vector<32x128xf32>
    %54 = tpu.matmul %53, %51, %cst_30 {dimension_numbers = #tpu.dot_dimension_numbers<[1], [0], [0], [1], [0, 0, 1, 1], [], []>} : vector<32x16xf32>, vector<16x128xf32>, vector<32x128xf32> -> vector<32x128xf32>
    %c0_31 = arith.constant 0 : index
    %c0_32 = arith.constant 0 : index
    %c0_33 = arith.constant 0 : index
    %55 = vector.load %arg9[%c0_31, %c0_32, %c0_33] : memref<4x32x1xf32, #tpu.memory_space<vmem>>, vector<1x32x1xf32>
    %56 = vector.shape_cast %55 : vector<1x32x1xf32> to vector<32x1xf32>
    %57 = vector.broadcast %56 : vector<32x1xf32> to vector<32x128xf32>
    %58 = arith.addf %54, %57 : vector<32x128xf32>
    %59 = vector.extract_strided_slice %58 {offsets = [0, 0], sizes = [16, 128], strides = [1, 1]} : vector<32x128xf32> to vector<16x128xf32>
    %60 = arith.addf %17, %59 : vector<16x128xf32>
    %61 = vector.extract_strided_slice %58 {offsets = [16, 0], sizes = [16, 128], strides = [1, 1]} : vector<32x128xf32> to vector<16x128xf32>
    %62 = arith.addf %61, %14 : vector<16x128xf32>
    %c1 = arith.constant 1 : index
    %c0_34 = arith.constant 0 : index
    %c0_35 = arith.constant 0 : index
    %63 = vector.load %arg15[%c1, %c0_34, %c0_35] : memref<4x16x128xf32, #tpu.memory_space<vmem>>, vector<1x16x128xf32>
    %64 = vector.shape_cast %63 : vector<1x16x128xf32> to vector<16x128xf32>
    %c1_36 = arith.constant 1 : index
    %c0_37 = arith.constant 0 : index
    %c0_38 = arith.constant 0 : index
    %65 = vector.load %arg15[%c1_36, %c0_37, %c0_38] : memref<4x16x128xf32, #tpu.memory_space<vmem>>, vector<1x16x128xf32>
    %66 = vector.shape_cast %65 : vector<1x16x128xf32> to vector<16x128xf32>
    %67 = vector.shape_cast %62 : vector<16x128xf32> to vector<1x16x128xf32>
    tpu.vector_store %arg15[%c1_36, %c0_37, %c0_38], %67 {strides = array<i32>} : memref<4x16x128xf32, #tpu.memory_space<vmem>>, vector<1x16x128xf32>,
    %c2_i32_39 = arith.constant 2 : i32
    %68 = tpu.dynamic_rotate %62 by %c2_i32_39 dim 1 : vector<16x128xf32>, i32 -> vector<16x128xf32>
    %c2_i32_40 = arith.constant 2 : i32
    %69 = tpu.dynamic_rotate %64 by %c2_i32_40 dim 1 : vector<16x128xf32>, i32 -> vector<16x128xf32>
    %70 = arith.select %26, %68, %69 : vector<16x128xi1>, vector<16x128xf32>
    %71 = tpu.concatenate %62, %70, %16 in 0 : vector<16x128xf32>, vector<16x128xf32>, vector<8x128xf32> -> vector<40x128xf32>
    %c1_41 = arith.constant 1 : index
    %c0_42 = arith.constant 0 : index
    %c0_43 = arith.constant 0 : index
    %72 = vector.load %arg6[%c1_41, %c0_42, %c0_43] : memref<4x32x40xf32, #tpu.memory_space<vmem>>, vector<1x32x40xf32>
    %73 = vector.shape_cast %72 : vector<1x32x40xf32> to vector<32x40xf32>
    %cst_44 = arith.constant dense<0.000000e+00> : vector<32x128xf32>
    %74 = tpu.matmul %73, %71, %cst_44 {dimension_numbers = #tpu.dot_dimension_numbers<[1], [0], [0], [1], [0, 0, 1, 1], [], []>} : vector<32x40xf32>, vector<40x128xf32>, vector<32x128xf32> -> vector<32x128xf32>
    %c1_45 = arith.constant 1 : index
    %c0_46 = arith.constant 0 : index
    %c0_47 = arith.constant 0 : index
    %75 = vector.load %arg7[%c1_45, %c0_46, %c0_47] : memref<4x32x1xf32, #tpu.memory_space<vmem>>, vector<1x32x1xf32>
    %76 = vector.shape_cast %75 : vector<1x32x1xf32> to vector<32x1xf32>
    %77 = vector.broadcast %76 : vector<32x1xf32> to vector<32x128xf32>
    %78 = arith.addf %74, %77 : vector<32x128xf32>
    %79 = vector.extract_strided_slice %78 {offsets = [0, 0], sizes = [16, 128], strides = [1, 1]} : vector<32x128xf32> to vector<16x128xf32>
    %80 = math.tanh %79 : vector<16x128xf32>
    %81 = vector.extract_strided_slice %78 {offsets = [16, 0], sizes = [16, 128], strides = [1, 1]} : vector<32x128xf32> to vector<16x128xf32>
    %82 = arith.negf %81 : vector<16x128xf32>
    %83 = math.exp %82 : vector<16x128xf32>
    %cst_48 = arith.constant 1.000000e+00 : f32
    %84 = vector.broadcast %cst_48 : f32 to vector<16x128xf32>
    %85 = arith.addf %84, %83 : vector<16x128xf32>
    %86 = arith.divf %84, %85 : vector<16x128xf32>
    %87 = arith.mulf %80, %86 : vector<16x128xf32>
    %c1_49 = arith.constant 1 : index
    %c0_50 = arith.constant 0 : index
    %c0_51 = arith.constant 0 : index
    %88 = vector.load %arg8[%c1_49, %c0_50, %c0_51] : memref<4x32x16xf32, #tpu.memory_space<vmem>>, vector<1x32x16xf32>
    %89 = vector.shape_cast %88 : vector<1x32x16xf32> to vector<32x16xf32>
    %cst_52 = arith.constant dense<0.000000e+00> : vector<32x128xf32>
    %90 = tpu.matmul %89, %87, %cst_52 {dimension_numbers = #tpu.dot_dimension_numbers<[1], [0], [0], [1], [0, 0, 1, 1], [], []>} : vector<32x16xf32>, vector<16x128xf32>, vector<32x128xf32> -> vector<32x128xf32>
    %c1_53 = arith.constant 1 : index
    %c0_54 = arith.constant 0 : index
    %c0_55 = arith.constant 0 : index
    %91 = vector.load %arg9[%c1_53, %c0_54, %c0_55] : memref<4x32x1xf32, #tpu.memory_space<vmem>>, vector<1x32x1xf32>
    %92 = vector.shape_cast %91 : vector<1x32x1xf32> to vector<32x1xf32>
    %93 = vector.broadcast %92 : vector<32x1xf32> to vector<32x128xf32>
    %94 = arith.addf %90, %93 : vector<32x128xf32>
    %95 = vector.extract_strided_slice %94 {offsets = [0, 0], sizes = [16, 128], strides = [1, 1]} : vector<32x128xf32> to vector<16x128xf32>
    %96 = arith.addf %60, %95 : vector<16x128xf32>
    %97 = vector.extract_strided_slice %94 {offsets = [16, 0], sizes = [16, 128], strides = [1, 1]} : vector<32x128xf32> to vector<16x128xf32>
    %98 = arith.addf %97, %62 : vector<16x128xf32>
    %c2 = arith.constant 2 : index
    %c0_56 = arith.constant 0 : index
    %c0_57 = arith.constant 0 : index
    %99 = vector.load %arg15[%c2, %c0_56, %c0_57] : memref<4x16x128xf32, #tpu.memory_space<vmem>>, vector<1x16x128xf32>
    %100 = vector.shape_cast %99 : vector<1x16x128xf32> to vector<16x128xf32>
    %c2_58 = arith.constant 2 : index
    %c0_59 = arith.constant 0 : index
    %c0_60 = arith.constant 0 : index
    %101 = vector.load %arg15[%c2_58, %c0_59, %c0_60] : memref<4x16x128xf32, #tpu.memory_space<vmem>>, vector<1x16x128xf32>
    %102 = vector.shape_cast %101 : vector<1x16x128xf32> to vector<16x128xf32>
    %103 = vector.shape_cast %98 : vector<16x128xf32> to vector<1x16x128xf32>
    tpu.vector_store %arg15[%c2_58, %c0_59, %c0_60], %103 {strides = array<i32>} : memref<4x16x128xf32, #tpu.memory_space<vmem>>, vector<1x16x128xf32>,
    %c1_i32_61 = arith.constant 1 : i32
    %104 = tpu.dynamic_rotate %98 by %c1_i32_61 dim 1 : vector<16x128xf32>, i32 -> vector<16x128xf32>
    %c1_i32_62 = arith.constant 1 : i32
    %105 = tpu.dynamic_rotate %100 by %c1_i32_62 dim 1 : vector<16x128xf32>, i32 -> vector<16x128xf32>
    %106 = arith.select %22, %104, %105 : vector<16x128xi1>, vector<16x128xf32>
    %107 = tpu.concatenate %98, %106, %16 in 0 : vector<16x128xf32>, vector<16x128xf32>, vector<8x128xf32> -> vector<40x128xf32>
    %c2_63 = arith.constant 2 : index
    %c0_64 = arith.constant 0 : index
    %c0_65 = arith.constant 0 : index
    %108 = vector.load %arg6[%c2_63, %c0_64, %c0_65] : memref<4x32x40xf32, #tpu.memory_space<vmem>>, vector<1x32x40xf32>
    %109 = vector.shape_cast %108 : vector<1x32x40xf32> to vector<32x40xf32>
    %cst_66 = arith.constant dense<0.000000e+00> : vector<32x128xf32>
    %110 = tpu.matmul %109, %107, %cst_66 {dimension_numbers = #tpu.dot_dimension_numbers<[1], [0], [0], [1], [0, 0, 1, 1], [], []>} : vector<32x40xf32>, vector<40x128xf32>, vector<32x128xf32> -> vector<32x128xf32>
    %c2_67 = arith.constant 2 : index
    %c0_68 = arith.constant 0 : index
    %c0_69 = arith.constant 0 : index
    %111 = vector.load %arg7[%c2_67, %c0_68, %c0_69] : memref<4x32x1xf32, #tpu.memory_space<vmem>>, vector<1x32x1xf32>
    %112 = vector.shape_cast %111 : vector<1x32x1xf32> to vector<32x1xf32>
    %113 = vector.broadcast %112 : vector<32x1xf32> to vector<32x128xf32>
    %114 = arith.addf %110, %113 : vector<32x128xf32>
    %115 = vector.extract_strided_slice %114 {offsets = [0, 0], sizes = [16, 128], strides = [1, 1]} : vector<32x128xf32> to vector<16x128xf32>
    %116 = math.tanh %115 : vector<16x128xf32>
    %117 = vector.extract_strided_slice %114 {offsets = [16, 0], sizes = [16, 128], strides = [1, 1]} : vector<32x128xf32> to vector<16x128xf32>
    %118 = arith.negf %117 : vector<16x128xf32>
    %119 = math.exp %118 : vector<16x128xf32>
    %cst_70 = arith.constant 1.000000e+00 : f32
    %120 = vector.broadcast %cst_70 : f32 to vector<16x128xf32>
    %121 = arith.addf %120, %119 : vector<16x128xf32>
    %122 = arith.divf %120, %121 : vector<16x128xf32>
    %123 = arith.mulf %116, %122 : vector<16x128xf32>
    %c2_71 = arith.constant 2 : index
    %c0_72 = arith.constant 0 : index
    %c0_73 = arith.constant 0 : index
    %124 = vector.load %arg8[%c2_71, %c0_72, %c0_73] : memref<4x32x16xf32, #tpu.memory_space<vmem>>, vector<1x32x16xf32>
    %125 = vector.shape_cast %124 : vector<1x32x16xf32> to vector<32x16xf32>
    %cst_74 = arith.constant dense<0.000000e+00> : vector<32x128xf32>
    %126 = tpu.matmul %125, %123, %cst_74 {dimension_numbers = #tpu.dot_dimension_numbers<[1], [0], [0], [1], [0, 0, 1, 1], [], []>} : vector<32x16xf32>, vector<16x128xf32>, vector<32x128xf32> -> vector<32x128xf32>
    %c2_75 = arith.constant 2 : index
    %c0_76 = arith.constant 0 : index
    %c0_77 = arith.constant 0 : index
    %127 = vector.load %arg9[%c2_75, %c0_76, %c0_77] : memref<4x32x1xf32, #tpu.memory_space<vmem>>, vector<1x32x1xf32>
    %128 = vector.shape_cast %127 : vector<1x32x1xf32> to vector<32x1xf32>
    %129 = vector.broadcast %128 : vector<32x1xf32> to vector<32x128xf32>
    %130 = arith.addf %126, %129 : vector<32x128xf32>
    %131 = vector.extract_strided_slice %130 {offsets = [0, 0], sizes = [16, 128], strides = [1, 1]} : vector<32x128xf32> to vector<16x128xf32>
    %132 = arith.addf %96, %131 : vector<16x128xf32>
    %133 = vector.extract_strided_slice %130 {offsets = [16, 0], sizes = [16, 128], strides = [1, 1]} : vector<32x128xf32> to vector<16x128xf32>
    %134 = arith.addf %133, %98 : vector<16x128xf32>
    %c3 = arith.constant 3 : index
    %c0_78 = arith.constant 0 : index
    %c0_79 = arith.constant 0 : index
    %135 = vector.load %arg15[%c3, %c0_78, %c0_79] : memref<4x16x128xf32, #tpu.memory_space<vmem>>, vector<1x16x128xf32>
    %136 = vector.shape_cast %135 : vector<1x16x128xf32> to vector<16x128xf32>
    %c3_80 = arith.constant 3 : index
    %c0_81 = arith.constant 0 : index
    %c0_82 = arith.constant 0 : index
    %137 = vector.load %arg15[%c3_80, %c0_81, %c0_82] : memref<4x16x128xf32, #tpu.memory_space<vmem>>, vector<1x16x128xf32>
    %138 = vector.shape_cast %137 : vector<1x16x128xf32> to vector<16x128xf32>
    %139 = vector.shape_cast %134 : vector<16x128xf32> to vector<1x16x128xf32>
    tpu.vector_store %arg15[%c3_80, %c0_81, %c0_82], %139 {strides = array<i32>} : memref<4x16x128xf32, #tpu.memory_space<vmem>>, vector<1x16x128xf32>,
    %c2_i32_83 = arith.constant 2 : i32
    %140 = tpu.dynamic_rotate %134 by %c2_i32_83 dim 1 : vector<16x128xf32>, i32 -> vector<16x128xf32>
    %c2_i32_84 = arith.constant 2 : i32
    %141 = tpu.dynamic_rotate %136 by %c2_i32_84 dim 1 : vector<16x128xf32>, i32 -> vector<16x128xf32>
    %142 = arith.select %26, %140, %141 : vector<16x128xi1>, vector<16x128xf32>
    %143 = tpu.concatenate %134, %142, %16 in 0 : vector<16x128xf32>, vector<16x128xf32>, vector<8x128xf32> -> vector<40x128xf32>
    %c3_85 = arith.constant 3 : index
    %c0_86 = arith.constant 0 : index
    %c0_87 = arith.constant 0 : index
    %144 = vector.load %arg6[%c3_85, %c0_86, %c0_87] : memref<4x32x40xf32, #tpu.memory_space<vmem>>, vector<1x32x40xf32>
    %145 = vector.shape_cast %144 : vector<1x32x40xf32> to vector<32x40xf32>
    %cst_88 = arith.constant dense<0.000000e+00> : vector<32x128xf32>
    %146 = tpu.matmul %145, %143, %cst_88 {dimension_numbers = #tpu.dot_dimension_numbers<[1], [0], [0], [1], [0, 0, 1, 1], [], []>} : vector<32x40xf32>, vector<40x128xf32>, vector<32x128xf32> -> vector<32x128xf32>
    %c3_89 = arith.constant 3 : index
    %c0_90 = arith.constant 0 : index
    %c0_91 = arith.constant 0 : index
    %147 = vector.load %arg7[%c3_89, %c0_90, %c0_91] : memref<4x32x1xf32, #tpu.memory_space<vmem>>, vector<1x32x1xf32>
    %148 = vector.shape_cast %147 : vector<1x32x1xf32> to vector<32x1xf32>
    %149 = vector.broadcast %148 : vector<32x1xf32> to vector<32x128xf32>
    %150 = arith.addf %146, %149 : vector<32x128xf32>
    %151 = vector.extract_strided_slice %150 {offsets = [0, 0], sizes = [16, 128], strides = [1, 1]} : vector<32x128xf32> to vector<16x128xf32>
    %152 = math.tanh %151 : vector<16x128xf32>
    %153 = vector.extract_strided_slice %150 {offsets = [16, 0], sizes = [16, 128], strides = [1, 1]} : vector<32x128xf32> to vector<16x128xf32>
    %154 = arith.negf %153 : vector<16x128xf32>
    %155 = math.exp %154 : vector<16x128xf32>
    %cst_92 = arith.constant 1.000000e+00 : f32
    %156 = vector.broadcast %cst_92 : f32 to vector<16x128xf32>
    %157 = arith.addf %156, %155 : vector<16x128xf32>
    %158 = arith.divf %156, %157 : vector<16x128xf32>
    %159 = arith.mulf %152, %158 : vector<16x128xf32>
    %c3_93 = arith.constant 3 : index
    %c0_94 = arith.constant 0 : index
    %c0_95 = arith.constant 0 : index
    %160 = vector.load %arg8[%c3_93, %c0_94, %c0_95] : memref<4x32x16xf32, #tpu.memory_space<vmem>>, vector<1x32x16xf32>
    %161 = vector.shape_cast %160 : vector<1x32x16xf32> to vector<32x16xf32>
    %cst_96 = arith.constant dense<0.000000e+00> : vector<32x128xf32>
    %162 = tpu.matmul %161, %159, %cst_96 {dimension_numbers = #tpu.dot_dimension_numbers<[1], [0], [0], [1], [0, 0, 1, 1], [], []>} : vector<32x16xf32>, vector<16x128xf32>, vector<32x128xf32> -> vector<32x128xf32>
    %c3_97 = arith.constant 3 : index
    %c0_98 = arith.constant 0 : index
    %c0_99 = arith.constant 0 : index
    %163 = vector.load %arg9[%c3_97, %c0_98, %c0_99] : memref<4x32x1xf32, #tpu.memory_space<vmem>>, vector<1x32x1xf32>
    %164 = vector.shape_cast %163 : vector<1x32x1xf32> to vector<32x1xf32>
    %165 = vector.broadcast %164 : vector<32x1xf32> to vector<32x128xf32>
    %166 = arith.addf %162, %165 : vector<32x128xf32>
    %167 = vector.extract_strided_slice %166 {offsets = [0, 0], sizes = [16, 128], strides = [1, 1]} : vector<32x128xf32> to vector<16x128xf32>
    %168 = arith.addf %132, %167 : vector<16x128xf32>
    %cst_100 = arith.constant 0.000000e+00 : f32
    %169 = vector.broadcast %cst_100 : f32 to vector<16x128xf32>
    %170 = arith.maximumf %168, %169 : vector<16x128xf32>
    %c0_101 = arith.constant 0 : index
    %c0_102 = arith.constant 0 : index
    %171 = vector.load %arg10[%c0_101, %c0_102] : memref<16x16xf32, #tpu.memory_space<vmem>>, vector<16x16xf32>
    %cst_103 = arith.constant dense<0.000000e+00> : vector<16x128xf32>
    %172 = tpu.matmul %171, %170, %cst_103 {dimension_numbers = #tpu.dot_dimension_numbers<[1], [0], [0], [1], [0, 0, 1, 1], [], []>} : vector<16x16xf32>, vector<16x128xf32>, vector<16x128xf32> -> vector<16x128xf32>
    %c0_104 = arith.constant 0 : index
    %c0_105 = arith.constant 0 : index
    %173 = vector.load %arg11[%c0_104, %c0_105] : memref<16x1xf32, #tpu.memory_space<vmem>>, vector<16x1xf32>
    %174 = vector.broadcast %173 : vector<16x1xf32> to vector<16x128xf32>
    %175 = arith.addf %172, %174 : vector<16x128xf32>
    %cst_106 = arith.constant 0.000000e+00 : f32
    %176 = vector.broadcast %cst_106 : f32 to vector<16x128xf32>
    %177 = arith.maximumf %175, %176 : vector<16x128xf32>
    %c0_107 = arith.constant 0 : index
    %c0_108 = arith.constant 0 : index
    %178 = vector.load %arg12[%c0_107, %c0_108] : memref<32x16xf32, #tpu.memory_space<vmem>>, vector<32x16xf32>
    %cst_109 = arith.constant dense<0.000000e+00> : vector<32x128xf32>
    %179 = tpu.matmul %178, %177, %cst_109 {dimension_numbers = #tpu.dot_dimension_numbers<[1], [0], [0], [1], [0, 0, 1, 1], [], []>} : vector<32x16xf32>, vector<16x128xf32>, vector<32x128xf32> -> vector<32x128xf32>
    %c0_110 = arith.constant 0 : index
    %c0_111 = arith.constant 0 : index
    %180 = vector.load %arg13[%c0_110, %c0_111] : memref<32x1xf32, #tpu.memory_space<vmem>>, vector<32x1xf32>
    %181 = vector.broadcast %180 : vector<32x1xf32> to vector<32x128xf32>
    %182 = arith.addf %179, %181 : vector<32x128xf32>
    %c0_112 = arith.constant 0 : index
    %c0_113 = arith.constant 0 : index
    %c0_114 = arith.constant 0 : index
    %183 = vector.load %arg14[%c0_112, %c0_113, %c0_114] : memref<1x32x128xf32, #tpu.memory_space<vmem>>, vector<1x32x128xf32>
    %184 = vector.shape_cast %183 : vector<1x32x128xf32> to vector<32x128xf32>
    %185 = vector.shape_cast %182 : vector<32x128xf32> to vector<1x32x128xf32>
    tpu.vector_store %arg14[%c0_112, %c0_113, %c0_114], %185 {strides = array<i32>} : memref<1x32x128xf32, #tpu.memory_space<vmem>>, vector<1x32x128xf32>,
    return
  }
  func.func @transform_0(%arg0: i32, %arg1: i32) -> (i32, i32, i32) {
    %c0_i32 = arith.constant 0 : i32
    %c0_i32_0 = arith.constant 0 : i32
    return %arg0, %c0_i32, %arg1 : i32, i32, i32
  }
  func.func @transform_1(%arg0: i32, %arg1: i32) -> (i32, i32, i32) {
    %c0_i32 = arith.constant 0 : i32
    %c0_i32_0 = arith.constant 0 : i32
    return %arg0, %c0_i32, %arg1 : i32, i32, i32
  }
  func.func @transform_2(%arg0: i32, %arg1: i32) -> (i32, i32) {
    %c0_i32 = arith.constant 0 : i32
    %c0_i32_0 = arith.constant 0 : i32
    %c0_i32_1 = arith.constant 0 : i32
    return %c0_i32, %c0_i32_0 : i32, i32
  }
  func.func @transform_3(%arg0: i32, %arg1: i32) -> (i32, i32) {
    %c0_i32 = arith.constant 0 : i32
    %c0_i32_0 = arith.constant 0 : i32
    %c0_i32_1 = arith.constant 0 : i32
    return %c0_i32, %c0_i32_0 : i32, i32
  }
  func.func @transform_4(%arg0: i32, %arg1: i32) -> (i32, i32, i32) {
    %c0_i32 = arith.constant 0 : i32
    %c0_i32_0 = arith.constant 0 : i32
    %c0_i32_1 = arith.constant 0 : i32
    %c0_i32_2 = arith.constant 0 : i32
    return %c0_i32, %c0_i32_0, %c0_i32_1 : i32, i32, i32
  }
  func.func @transform_5(%arg0: i32, %arg1: i32) -> (i32, i32, i32) {
    %c0_i32 = arith.constant 0 : i32
    %c0_i32_0 = arith.constant 0 : i32
    %c0_i32_1 = arith.constant 0 : i32
    %c0_i32_2 = arith.constant 0 : i32
    return %c0_i32, %c0_i32_0, %c0_i32_1 : i32, i32, i32
  }
  func.func @transform_6(%arg0: i32, %arg1: i32) -> (i32, i32, i32) {
    %c0_i32 = arith.constant 0 : i32
    %c0_i32_0 = arith.constant 0 : i32
    %c0_i32_1 = arith.constant 0 : i32
    %c0_i32_2 = arith.constant 0 : i32
    return %c0_i32, %c0_i32_0, %c0_i32_1 : i32, i32, i32
  }
  func.func @transform_7(%arg0: i32, %arg1: i32) -> (i32, i32, i32) {
    %c0_i32 = arith.constant 0 : i32
    %c0_i32_0 = arith.constant 0 : i32
    %c0_i32_1 = arith.constant 0 : i32
    %c0_i32_2 = arith.constant 0 : i32
    return %c0_i32, %c0_i32_0, %c0_i32_1 : i32, i32, i32
  }
  func.func @transform_8(%arg0: i32, %arg1: i32) -> (i32, i32) {
    %c0_i32 = arith.constant 0 : i32
    %c0_i32_0 = arith.constant 0 : i32
    %c0_i32_1 = arith.constant 0 : i32
    return %c0_i32, %c0_i32_0 : i32, i32
  }
  func.func @transform_9(%arg0: i32, %arg1: i32) -> (i32, i32) {
    %c0_i32 = arith.constant 0 : i32
    %c0_i32_0 = arith.constant 0 : i32
    %c0_i32_1 = arith.constant 0 : i32
    return %c0_i32, %c0_i32_0 : i32, i32
  }
  func.func @transform_10(%arg0: i32, %arg1: i32) -> (i32, i32) {
    %c0_i32 = arith.constant 0 : i32
    %c0_i32_0 = arith.constant 0 : i32
    %c0_i32_1 = arith.constant 0 : i32
    return %c0_i32, %c0_i32_0 : i32, i32
  }
  func.func @transform_11(%arg0: i32, %arg1: i32) -> (i32, i32) {
    %c0_i32 = arith.constant 0 : i32
    %c0_i32_0 = arith.constant 0 : i32
    %c0_i32_1 = arith.constant 0 : i32
    return %c0_i32, %c0_i32_0 : i32, i32
  }
  func.func @transform_12(%arg0: i32, %arg1: i32) -> (i32, i32, i32) {
    %c0_i32 = arith.constant 0 : i32
    %c0_i32_0 = arith.constant 0 : i32
    return %arg0, %c0_i32, %arg1 : i32, i32, i32
  }
}

</mosaic_0001>

<llo_original>
// kernel: tpu_custom_call.1
$region0: #{tpu_custom_call.1}
  #allocation0 [shape = 'u32[]', space=smem, size = 0x4, offset = 0x4, fixed_abs, tag = 'smem constant byte address 0x4 - core index']
  #allocation1 [shape = 'u32[144,128]{1,0:T(1,128)}', space=vmem, size = 0x12000, scoped, tag = 'internal scratch']
  #allocation2 [shape = 'f32[4,16,128]{2,1,0:T(8,128)}', space=vmem, size = 0x8000, scoped, tag = 'scratch operand']
  %s0 = inlined_call_operand.vmem [shape: s32[2,1,256], index: 0, kind: input, shape index: {}]
  %s1 = inlined_call_operand.vmem [shape: f32[2,8,256], index: 1, kind: input, shape index: {}]
  %s2 = inlined_call_operand.vmem [shape: f32[16,32], index: 2, kind: input, shape index: {}]
  %s3 = inlined_call_operand.vmem [shape: f32[16,1], index: 3, kind: input, shape index: {}]
  %s4 = inlined_call_operand.vmem [shape: f32[4,32,40], index: 4, kind: input, shape index: {}]
  %s5 = inlined_call_operand.vmem [shape: f32[4,32,1], index: 5, kind: input, shape index: {}]
  %s6 = inlined_call_operand.vmem [shape: f32[4,32,16], index: 6, kind: input, shape index: {}]
  %s7 = inlined_call_operand.vmem [shape: f32[4,32,1], index: 7, kind: input, shape index: {}]
  %s8 = inlined_call_operand.vmem [shape: f32[16,16], index: 8, kind: input, shape index: {}]
  %s9 = inlined_call_operand.vmem [shape: f32[16,1], index: 9, kind: input, shape index: {}]
  %s10 = inlined_call_operand.vmem [shape: f32[32,16], index: 10, kind: input, shape index: {}]
  %s11 = inlined_call_operand.vmem [shape: f32[32,1], index: 11, kind: input, shape index: {}]
  %s12 = inlined_call_operand.hbm [shape: f32[2,32,256], index: 12, kind: output, shape index: {}]
  %s13 = sld [smem:[#allocation0]]
  $region85: #{tpu_custom_call.1} parent=0
    _
  %s15 = ssub.s32 1, %s13
  %s16 = scalar_select 0, %s15, %s13
  $region1: #{tpu_custom_call.1} parent=0
    #allocation3 [shape = 'u8[32768]{0}', space=vmem, size = 0x8000, scoped, tag = 'output window, operand 0']
    #allocation4 [shape = 's32[2]{0}', space=sflag, size = 0x8, scoped, tag = 'scoped memory for tpu_custom_call.1']
    %17 = vsyncpa [#allocation4], 0
    %s18 = scalar_lea.sflag [#allocation4], 1
    %19 = vsyncpa %s18, 0
    loop: start=0, step=1, limit=6
    $region2: #{tpu_custom_call.1} parent=1 // loop_pre_header
      _
    $region3: #{tpu_custom_call.1} parent=1 // loop_header
      %s21 = sphi 0, %s25
      %p22 = scmp.ge.s32.totalorder %s21, 6
      %s28 = sphi 0, %s40
      %s29 = sphi 0, %s36
      %s30 = sphi 0, %s28
      %s31 = sphi 0, %s29
      %s32 = sphi 0, %s30
      %s33 = sphi 0, %s31
      %s45 = sphi 0, %s47
      %s48 = sphi 0, %s45
      %s49 = sphi 0, %s48
      %s65 = sphi 0, %s49
      %s73 = sphi 0, %s75
      %s76 = sphi 0, %s73
      %s77 = sphi 0, %s76
      %s93 = sphi 0, %s77
      %s97 = sphi 0, %s97
      %s99 = sphi 0, %s97
      %s100 = sphi 0, %s99
      %s114 = sphi 0, %s100
      %s118 = sphi 0, %s118
      %s120 = sphi 0, %s118
      %s121 = sphi 0, %s120
      %s135 = sphi 0, %s121
      %s139 = sphi 0, %s139
      %s141 = sphi 0, %s139
      %s142 = sphi 0, %s141
      %s156 = sphi 0, %s142
      %s160 = sphi 0, %s160
      %s162 = sphi 0, %s160
      %s163 = sphi 0, %s162
      %s177 = sphi 0, %s163
      %s181 = sphi 0, %s181
      %s183 = sphi 0, %s181
      %s184 = sphi 0, %s183
      %s198 = sphi 0, %s184
      %s202 = sphi 0, %s202
      %s204 = sphi 0, %s202
      %s205 = sphi 0, %s204
      %s219 = sphi 0, %s205
      %s223 = sphi 0, %s223
      %s225 = sphi 0, %s223
      %s226 = sphi 0, %s225
      %s240 = sphi 0, %s226
      %s244 = sphi 0, %s244
      %s246 = sphi 0, %s244
      %s247 = sphi 0, %s246
      %s261 = sphi 0, %s247
      %s265 = sphi 0, %s265
      %s267 = sphi 0, %s265
      %s268 = sphi 0, %s267
      %s282 = sphi 0, %s268
      %s286 = sphi 0, %s286
      %s288 = sphi 0, %s286
      %s289 = sphi 0, %s288
      %s303 = sphi 0, %s289
      %s311 = sphi 0, %s313
      %s314 = sphi 0, %s311
      %s315 = sphi 0, %s314
      %s331 = sphi 0, %s315
    $region4: #{tpu_custom_call.1} parent=1 // loop_header_branch
      %24 = sbr.rel (%p22) target = $region8
    $region5: #{tpu_custom_call.1} parent=1 // loop_body
      %s26 = ssub.s32 %s21, 1
      %s27 = ssub.s32 %s21, 2
      %s34 = sadd.s32 1, %s29
      %p35 = scmp.ge.s32.totalorder %s34, 2
      %s36 = scalar_select %p35, 0, %s34
      %s37 = sadd.s32 1, %s28
      %s38 = scalar_select %p35, %s37, %s28
      %p39 = scmp.ge.s32.totalorder %s38, 2
      %s40 = scalar_select %p39, 0, %s38
      %s41 = ssub.s32 %s28, %s40
      %s42 = ssub.s32 %s29, %s36
      %s43 = sor.u32 %s41, %s42
      %p44 = scmp.eq.s32.totalorder %s43, 0
      %s46 = sadd.s32 %s45, 1
      %s47 = scalar_select %p44, %s45, %s46
      %p50 = pneg %p44
      %p51 = scmp.eq.s32.totalorder %s21, 3
      %p52 = por %p50, %p51
      %p53 = scmp.ne.s32.totalorder %s45, %s48
      %p54 = scmp.eq.s32.totalorder %s21, 0
      %p55 = por %p53, %p54
      %p56 = scmp.ne.s32.totalorder %s45, %s48
      %p57 = scmp.eq.s32.totalorder %s26, 3
      %p58 = por %p56, %p57
      %p59 = scmp.ne.s32.totalorder %s48, %s49
      %p60 = scmp.eq.s32.totalorder %s26, 0
      %p61 = por %p59, %p60
      %p62 = scmp.ne.s32.totalorder %s48, %s49
      %p63 = scmp.eq.s32.totalorder %s27, 3
      %p64 = por %p62, %p63
      %p66 = scmp.ne.s32.totalorder %s49, %s65
      %p67 = scmp.eq.s32.totalorder %s27, 0
      %p68 = por %p66, %p67
      %s69 = ssub.s32 %s28, %s40
      %s70 = ssub.s32 %s29, %s36
      %s71 = sor.u32 %s69, %s70
      %p72 = scmp.eq.s32.totalorder %s71, 0
      %s74 = sadd.s32 %s73, 1
      %s75 = scalar_select %p72, %s73, %s74
      %p78 = pneg %p72
      %p79 = scmp.eq.s32.totalorder %s21, 3
      %p80 = por %p78, %p79
      %p81 = scmp.ne.s32.totalorder %s73, %s76
      %p82 = scmp.eq.s32.totalorder %s21, 0
      %p83 = por %p81, %p82
      %p84 = scmp.ne.s32.totalorder %s73, %s76
      %p85 = scmp.eq.s32.totalorder %s26, 3
      %p86 = por %p84, %p85
      %p87 = scmp.ne.s32.totalorder %s76, %s77
      %p88 = scmp.eq.s32.totalorder %s26, 0
      %p89 = por %p87, %p88
      %p90 = scmp.ne.s32.totalorder %s76, %s77
      %p91 = scmp.eq.s32.totalorder %s27, 3
      %p92 = por %p90, %p91
      %p94 = scmp.ne.s32.totalorder %s77, %s93
      %p95 = scmp.eq.s32.totalorder %s27, 0
      %p96 = por %p94, %p95
      %s98 = sadd.s32 %s97, 1
      %p101 = scmp.eq.s32.totalorder %s21, 3
      %p102 = scmp.ne.s32.totalorder %s97, %s99
      %p103 = scmp.eq.s32.totalorder %s21, 0
      %p104 = por %p102, %p103
      %p105 = scmp.ne.s32.totalorder %s97, %s99
      %p106 = scmp.eq.s32.totalorder %s26, 3
      %p107 = por %p105, %p106
      %p108 = scmp.ne.s32.totalorder %s99, %s100
      %p109 = scmp.eq.s32.totalorder %s26, 0
      %p110 = por %p108, %p109
      %p111 = scmp.ne.s32.totalorder %s99, %s100
      %p112 = scmp.eq.s32.totalorder %s27, 3
      %p113 = por %p111, %p112
      %p115 = scmp.ne.s32.totalorder %s100, %s114
      %p116 = scmp.eq.s32.totalorder %s27, 0
      %p117 = por %p115, %p116
      %s119 = sadd.s32 %s118, 1
      %p122 = scmp.eq.s32.totalorder %s21, 3
      %p123 = scmp.ne.s32.totalorder %s118, %s120
      %p124 = scmp.eq.s32.totalorder %s21, 0
      %p125 = por %p123, %p124
      %p126 = scmp.ne.s32.totalorder %s118, %s120
      %p127 = scmp.eq.s32.totalorder %s26, 3
      %p128 = por %p126, %p127
      %p129 = scmp.ne.s32.totalorder %s120, %s121
      %p130 = scmp.eq.s32.totalorder %s26, 0
      %p131 = por %p129, %p130
      %p132 = scmp.ne.s32.totalorder %s120, %s121
      %p133 = scmp.eq.s32.totalorder %s27, 3
      %p134 = por %p132, %p133
      %p136 = scmp.ne.s32.totalorder %s121, %s135
      %p137 = scmp.eq.s32.totalorder %s27, 0
      %p138 = por %p136, %p137
      %s140 = sadd.s32 %s139, 1
      %p143 = scmp.eq.s32.totalorder %s21, 3
      %p144 = scmp.ne.s32.totalorder %s139, %s141
      %p145 = scmp.eq.s32.totalorder %s21, 0
      %p146 = por %p144, %p145
      %p147 = scmp.ne.s32.totalorder %s139, %s141
      %p148 = scmp.eq.s32.totalorder %s26, 3
      %p149 = por %p147, %p148
      %p150 = scmp.ne.s32.totalorder %s141, %s142
      %p151 = scmp.eq.s32.totalorder %s26, 0
      %p152 = por %p150, %p151
      %p153 = scmp.ne.s32.totalorder %s141, %s142
      %p154 = scmp.eq.s32.totalorder %s27, 3
      %p155 = por %p153, %p154
      %p157 = scmp.ne.s32.totalorder %s142, %s156
      %p158 = scmp.eq.s32.totalorder %s27, 0
      %p159 = por %p157, %p158
      %s161 = sadd.s32 %s160, 1
      %p164 = scmp.eq.s32.totalorder %s21, 3
      %p165 = scmp.ne.s32.totalorder %s160, %s162
      %p166 = scmp.eq.s32.totalorder %s21, 0
      %p167 = por %p165, %p166
      %p168 = scmp.ne.s32.totalorder %s160, %s162
      %p169 = scmp.eq.s32.totalorder %s26, 3
      %p170 = por %p168, %p169
      %p171 = scmp.ne.s32.totalorder %s162, %s163
      %p172 = scmp.eq.s32.totalorder %s26, 0
      %p173 = por %p171, %p172
      %p174 = scmp.ne.s32.totalorder %s162, %s163
      %p175 = scmp.eq.s32.totalorder %s27, 3
      %p176 = por %p174, %p175
      %p178 = scmp.ne.s32.totalorder %s163, %s177
      %p179 = scmp.eq.s32.totalorder %s27, 0
      %p180 = por %p178, %p179
      %s182 = sadd.s32 %s181, 1
      %p185 = scmp.eq.s32.totalorder %s21, 3
      %p186 = scmp.ne.s32.totalorder %s181, %s183
      %p187 = scmp.eq.s32.totalorder %s21, 0
      %p188 = por %p186, %p187
      %p189 = scmp.ne.s32.totalorder %s181, %s183
      %p190 = scmp.eq.s32.totalorder %s26, 3
      %p191 = por %p189, %p190
      %p192 = scmp.ne.s32.totalorder %s183, %s184
      %p193 = scmp.eq.s32.totalorder %s26, 0
      %p194 = por %p192, %p193
      %p195 = scmp.ne.s32.totalorder %s183, %s184
      %p196 = scmp.eq.s32.totalorder %s27, 3
      %p197 = por %p195, %p196
      %p199 = scmp.ne.s32.totalorder %s184, %s198
      %p200 = scmp.eq.s32.totalorder %s27, 0
      %p201 = por %p199, %p200
      %s203 = sadd.s32 %s202, 1
      %p206 = scmp.eq.s32.totalorder %s21, 3
      %p207 = scmp.ne.s32.totalorder %s202, %s204
      %p208 = scmp.eq.s32.totalorder %s21, 0
      %p209 = por %p207, %p208
      %p210 = scmp.ne.s32.totalorder %s202, %s204
      %p211 = scmp.eq.s32.totalorder %s26, 3
      %p212 = por %p210, %p211
      %p213 = scmp.ne.s32.totalorder %s204, %s205
      %p214 = scmp.eq.s32.totalorder %s26, 0
      %p215 = por %p213, %p214
      %p216 = scmp.ne.s32.totalorder %s204, %s205
      %p217 = scmp.eq.s32.totalorder %s27, 3
      %p218 = por %p216, %p217
      %p220 = scmp.ne.s32.totalorder %s205, %s219
      %p221 = scmp.eq.s32.totalorder %s27, 0
      %p222 = por %p220, %p221
      %s224 = sadd.s32 %s223, 1
      %p227 = scmp.eq.s32.totalorder %s21, 3
      %p228 = scmp.ne.s32.totalorder %s223, %s225
      %p229 = scmp.eq.s32.totalorder %s21, 0
      %p230 = por %p228, %p229
      %p231 = scmp.ne.s32.totalorder %s223, %s225
      %p232 = scmp.eq.s32.totalorder %s26, 3
      %p233 = por %p231, %p232
      %p234 = scmp.ne.s32.totalorder %s225, %s226
      %p235 = scmp.eq.s32.totalorder %s26, 0
      %p236 = por %p234, %p235
      %p237 = scmp.ne.s32.totalorder %s225, %s226
      %p238 = scmp.eq.s32.totalorder %s27, 3
      %p239 = por %p237, %p238
      %p241 = scmp.ne.s32.totalorder %s226, %s240
      %p242 = scmp.eq.s32.totalorder %s27, 0
      %p243 = por %p241, %p242
      %s245 = sadd.s32 %s244, 1
      %p248 = scmp.eq.s32.totalorder %s21, 3
      %p249 = scmp.ne.s32.totalorder %s244, %s246
      %p250 = scmp.eq.s32.totalorder %s21, 0
      %p251 = por %p249, %p250
      %p252 = scmp.ne.s32.totalorder %s244, %s246
      %p253 = scmp.eq.s32.totalorder %s26, 3
      %p254 = por %p252, %p253
      %p255 = scmp.ne.s32.totalorder %s246, %s247
      %p256 = scmp.eq.s32.totalorder %s26, 0
      %p257 = por %p255, %p256
      %p258 = scmp.ne.s32.totalorder %s246, %s247
      %p259 = scmp.eq.s32.totalorder %s27, 3
      %p260 = por %p258, %p259
      %p262 = scmp.ne.s32.totalorder %s247, %s261
      %p263 = scmp.eq.s32.totalorder %s27, 0
      %p264 = por %p262, %p263
      %s266 = sadd.s32 %s265, 1
      %p269 = scmp.eq.s32.totalorder %s21, 3
      %p270 = scmp.ne.s32.totalorder %s265, %s267
      %p271 = scmp.eq.s32.totalorder %s21, 0
      %p272 = por %p270, %p271
      %p273 = scmp.ne.s32.totalorder %s265, %s267
      %p274 = scmp.eq.s32.totalorder %s26, 3
      %p275 = por %p273, %p274
      %p276 = scmp.ne.s32.totalorder %s267, %s268
      %p277 = scmp.eq.s32.totalorder %s26, 0
      %p278 = por %p276, %p277
      %p279 = scmp.ne.s32.totalorder %s267, %s268
      %p280 = scmp.eq.s32.totalorder %s27, 3
      %p281 = por %p279, %p280
      %p283 = scmp.ne.s32.totalorder %s268, %s282
      %p284 = scmp.eq.s32.totalorder %s27, 0
      %p285 = por %p283, %p284
      %s287 = sadd.s32 %s286, 1
      %p290 = scmp.eq.s32.totalorder %s21, 3
      %p291 = scmp.ne.s32.totalorder %s286, %s288
      %p292 = scmp.eq.s32.totalorder %s21, 0
      %p293 = por %p291, %p292
      %p294 = scmp.ne.s32.totalorder %s286, %s288
      %p295 = scmp.eq.s32.totalorder %s26, 3
      %p296 = por %p294, %p295
      %p297 = scmp.ne.s32.totalorder %s288, %s289
      %p298 = scmp.eq.s32.totalorder %s26, 0
      %p299 = por %p297, %p298
      %p300 = scmp.ne.s32.totalorder %s288, %s289
      %p301 = scmp.eq.s32.totalorder %s27, 3
      %p302 = por %p300, %p301
      %p304 = scmp.ne.s32.totalorder %s289, %s303
      %p305 = scmp.eq.s32.totalorder %s27, 0
      %p306 = por %p304, %p305
      %s307 = ssub.s32 %s28, %s40
      %s308 = ssub.s32 %s29, %s36
      %s309 = sor.u32 %s307, %s308
      %p310 = scmp.eq.s32.totalorder %s309, 0
      %s312 = sadd.s32 %s311, 1
      %s313 = scalar_select %p310, %s311, %s312
      %p316 = pneg %p310
      %p317 = scmp.eq.s32.totalorder %s21, 3
      %p318 = por %p316, %p317
      %p319 = scmp.ne.s32.totalorder %s311, %s314
      %p320 = scmp.eq.s32.totalorder %s21, 0
      %p321 = por %p319, %p320
      %p322 = scmp.ne.s32.totalorder %s311, %s314
      %p323 = scmp.eq.s32.totalorder %s26, 3
      %p324 = por %p322, %p323
      %p325 = scmp.ne.s32.totalorder %s314, %s315
      %p326 = scmp.eq.s32.totalorder %s26, 0
      %p327 = por %p325, %p326
      %p328 = scmp.ne.s32.totalorder %s314, %s315
      %p329 = scmp.eq.s32.totalorder %s27, 3
      %p330 = por %p328, %p329
      %p332 = scmp.ne.s32.totalorder %s315, %s331
      %p333 = scmp.eq.s32.totalorder %s27, 0
      %p334 = por %p332, %p333
      %p335 = scmp.le.s32.totalorder 1, %s21
      %p336 = scmp.lt.s32.totalorder %s21, 5
      %p337 = pnand %p335, %p336
      %p338 = pneg %p337
      // Predicated region
      $region9: #{tpu_custom_call.1} parent=5 // pred_check
        _
      $region10: #{tpu_custom_call.1} parent=5 // pred_check_branch
        %340 = sbr.rel (%p337) target = $region12
      $region11: #{tpu_custom_call.1} parent=5 // pred_region
        %s341 = ssub.s32 %s21, 1
        // Predicated region
        $region13: #{tpu_custom_call.1} parent=11 // pred_check
          %p342 = pneg %p110
        $region14: #{tpu_custom_call.1} parent=11 // pred_check_branch
          %344 = sbr.rel (%p342) target = $region16
        $region15: #{tpu_custom_call.1} parent=11 // pred_region
          _
        $region16: #{tpu_custom_call.1} parent=11 // pred_fallthru
          _
        // Predicated region
        $region17: #{tpu_custom_call.1} parent=11 // pred_check
          %p345 = pneg %p131
        $region18: #{tpu_custom_call.1} parent=11 // pred_check_branch
          %347 = sbr.rel (%p345) target = $region20
        $region19: #{tpu_custom_call.1} parent=11 // pred_region
          _
        $region20: #{tpu_custom_call.1} parent=11 // pred_fallthru
          _
        // Predicated region
        $region21: #{tpu_custom_call.1} parent=11 // pred_check
          %p348 = pneg %p152
        $region22: #{tpu_custom_call.1} parent=11 // pred_check_branch
          %350 = sbr.rel (%p348) target = $region24
        $region23: #{tpu_custom_call.1} parent=11 // pred_region
          _
        $region24: #{tpu_custom_call.1} parent=11 // pred_fallthru
          _
        // Predicated region
        $region25: #{tpu_custom_call.1} parent=11 // pred_check
          %p351 = pneg %p173
        $region26: #{tpu_custom_call.1} parent=11 // pred_check_branch
          %353 = sbr.rel (%p351) target = $region28
        $region27: #{tpu_custom_call.1} parent=11 // pred_region
          _
        $region28: #{tpu_custom_call.1} parent=11 // pred_fallthru
          _
        // Predicated region
        $region29: #{tpu_custom_call.1} parent=11 // pred_check
          %p354 = pneg %p194
        $region30: #{tpu_custom_call.1} parent=11 // pred_check_branch
          %356 = sbr.rel (%p354) target = $region32
        $region31: #{tpu_custom_call.1} parent=11 // pred_region
          _
        $region32: #{tpu_custom_call.1} parent=11 // pred_fallthru
          _
        // Predicated region
        $region33: #{tpu_custom_call.1} parent=11 // pred_check
          %p357 = pneg %p215
        $region34: #{tpu_custom_call.1} parent=11 // pred_check_branch
          %359 = sbr.rel (%p357) target = $region36
        $region35: #{tpu_custom_call.1} parent=11 // pred_region
          _
        $region36: #{tpu_custom_call.1} parent=11 // pred_fallthru
          _
        // Predicated region
        $region37: #{tpu_custom_call.1} parent=11 // pred_check
          %p360 = pneg %p236
        $region38: #{tpu_custom_call.1} parent=11 // pred_check_branch
          %362 = sbr.rel (%p360) target = $region40
        $region39: #{tpu_custom_call.1} parent=11 // pred_region
          _
        $region40: #{tpu_custom_call.1} parent=11 // pred_fallthru
          _
        // Predicated region
        $region41: #{tpu_custom_call.1} parent=11 // pred_check
          %p363 = pneg %p257
        $region42: #{tpu_custom_call.1} parent=11 // pred_check_branch
          %365 = sbr.rel (%p363) target = $region44
        $region43: #{tpu_custom_call.1} parent=11 // pred_region
          _
        $region44: #{tpu_custom_call.1} parent=11 // pred_fallthru
          _
        // Predicated region
        $region45: #{tpu_custom_call.1} parent=11 // pred_check
          %p366 = pneg %p278
        $region46: #{tpu_custom_call.1} parent=11 // pred_check_branch
          %368 = sbr.rel (%p366) target = $region48
        $region47: #{tpu_custom_call.1} parent=11 // pred_region
          _
        $region48: #{tpu_custom_call.1} parent=11 // pred_fallthru
          _
        // Predicated region
        $region49: #{tpu_custom_call.1} parent=11 // pred_check
          %p369 = pneg %p299
        $region50: #{tpu_custom_call.1} parent=11 // pred_check_branch
          %371 = sbr.rel (%p369) target = $region52
        $region51: #{tpu_custom_call.1} parent=11 // pred_region
          _
        $region52: #{tpu_custom_call.1} parent=11 // pred_fallthru
          _
      $region12: #{tpu_custom_call.1} parent=5 // pred_fallthru
        _
      %p372 = scmp.lt.s32.totalorder %s21, 4
      // Predicated region
      $region53: #{tpu_custom_call.1} parent=5 // pred_check
        %p373 = pneg %p372
      $region54: #{tpu_custom_call.1} parent=5 // pred_check_branch
        %375 = sbr.rel (%p373) target = $region56
      $region55: #{tpu_custom_call.1} parent=5 // pred_region
        // Predicated region
        $region57: #{tpu_custom_call.1} parent=55 // pred_check
          %p376 = pneg %p55
        $region58: #{tpu_custom_call.1} parent=55 // pred_check_branch
          %378 = sbr.rel (%p376) target = $region60
        $region59: #{tpu_custom_call.1} parent=55 // pred_region
          %p379 = scmp.lt.s32.totalorder %s28, 1
          %s380 = scalar_select %p379, %s28, 1
          %p381 = scmp.lt.s32.totalorder %s29, 1
          %s382 = scalar_select %p381, %s29, 1
          %s383 = smul.addr %s380, 2
          %s384 = sadd.s32 %s382, %s383
          %s385 = scalar_lea.vmem %s0, %s384
        $region60: #{tpu_custom_call.1} parent=55 // pred_fallthru
          _
        // Predicated region
        $region61: #{tpu_custom_call.1} parent=55 // pred_check
          %p386 = pneg %p83
        $region62: #{tpu_custom_call.1} parent=55 // pred_check_branch
          %388 = sbr.rel (%p386) target = $region64
        $region63: #{tpu_custom_call.1} parent=55 // pred_region
          %p389 = scmp.lt.s32.totalorder %s28, 1
          %s390 = scalar_select %p389, %s28, 1
          %p391 = scmp.lt.s32.totalorder %s29, 1
          %s392 = scalar_select %p391, %s29, 1
          %s393 = smul.addr %s390, 2
          %s394 = sadd.s32 %s392, %s393
          %s395 = smul.addr %s394, 8
          %s396 = scalar_lea.vmem %s1, %s395
        $region64: #{tpu_custom_call.1} parent=55 // pred_fallthru
          _
      $region56: #{tpu_custom_call.1} parent=5 // pred_fallthru
        _
      %p397 = scmp.le.s32.totalorder 1, %s21
      %p398 = scmp.lt.s32.totalorder %s21, 5
      %p399 = pnand %p397, %p398
      %p400 = pneg %p399
      // Predicated region
      $region65: #{tpu_custom_call.1} parent=5 // pred_check
        _
      $region66: #{tpu_custom_call.1} parent=5 // pred_check_branch
        %402 = sbr.rel (%p399) target = $region68
      $region67: #{tpu_custom_call.1} parent=5 // pred_region
        %s403 = ssub.s32 %s21, 1
        %p404 = scmp.lt.s32.totalorder %s30, 1
        %s405 = scalar_select %p404, %s30, 1
        %p406 = scmp.lt.s32.totalorder %s31, 1
        %s407 = scalar_select %p406, %s31, 1
        %s408 = smul.addr %s405, 2
        %s409 = sadd.s32 %s407, %s408
        %s410 = scalar_lea.vmem %s0, %s409
        %p411 = pneg %p61
        %p412 = pneg %p58
        %p413 = scmp.lt.s32.totalorder %s30, 1
        %s414 = scalar_select %p413, %s30, 1
        %p415 = scmp.lt.s32.totalorder %s31, 1
        %s416 = scalar_select %p415, %s31, 1
        %s417 = smul.addr %s414, 2
        %s418 = sadd.s32 %s416, %s417
        %s419 = smul.addr %s418, 8
        %s420 = scalar_lea.vmem %s1, %s419
        %p421 = pneg %p89
        %p422 = pneg %p86
        %p423 = pneg %p110
        %p424 = pneg %p107
        %p425 = pneg %p131
        %p426 = pneg %p128
        %p427 = pneg %p152
        %p428 = pneg %p149
        %p429 = pneg %p173
        %p430 = pneg %p170
        %p431 = pneg %p194
        %p432 = pneg %p191
        %p433 = pneg %p215
        %p434 = pneg %p212
        %p435 = pneg %p236
        %p436 = pneg %p233
        %p437 = pneg %p257
        %p438 = pneg %p254
        %p439 = pneg %p278
        %p440 = pneg %p275
        %p441 = pneg %p299
        %p442 = pneg %p296
        %p443 = pneg %p327
        %p444 = pneg %p324
        %s445 = sand.u32 %s314, 1
        %s446 = scalar_lea.sflag [#allocation4], %s445
        %s447 = sand.u32 %s314, 1
        %s448 = smul.addr %s447, 32
        %s449 = scalar_lea.vmem [#allocation3], %s448
        %p450 = scmp.lt.s32.totalorder %s30, 1
        %s451 = scalar_select %p450, %s30, 1
        %p452 = scmp.lt.s32.totalorder %s31, 1
        %s453 = scalar_select %p452, %s31, 1
        %s454 = smul.addr %s451, 2
        %s455 = sadd.s32 %s453, %s454
        %s456 = scalar_lea.vmem %s0, %s455
        %p457 = scmp.lt.s32.totalorder %s30, 1
        %s458 = scalar_select %p457, %s30, 1
        %p459 = scmp.lt.s32.totalorder %s31, 1
        %s460 = scalar_select %p459, %s31, 1
        %s461 = smul.addr %s458, 2
        %s462 = sadd.s32 %s460, %s461
        %s463 = smul.addr %s462, 8
        %s464 = scalar_lea.vmem %s1, %s463
        %p465 = scmp.eq.s32.totalorder %s31, 0
        // Predicated region
        $region69: #{tpu_custom_call.1} parent=67 // pred_check
          %p466 = pneg %p465
        $region70: #{tpu_custom_call.1} parent=67 // pred_check_branch
          %468 = sbr.rel (%p466) target = $region72
        $region71: #{tpu_custom_call.1} parent=67 // pred_region
          %469 = vst [vmem:[#allocation2] sm:$0xff] 0.0
          %470 = vst [vmem:[#allocation2 + $0x8] sm:$0xff] 0.0
          %471 = vst [vmem:[#allocation2 + $0x10] sm:$0xff] 0.0
          %472 = vst [vmem:[#allocation2 + $0x18] sm:$0xff] 0.0
          %473 = vst [vmem:[#allocation2 + $0x20] sm:$0xff] 0.0
          %474 = vst [vmem:[#allocation2 + $0x28] sm:$0xff] 0.0
          %475 = vst [vmem:[#allocation2 + $0x30] sm:$0xff] 0.0
          %476 = vst [vmem:[#allocation2 + $0x38] sm:$0xff] 0.0
        $region72: #{tpu_custom_call.1} parent=67 // pred_fallthru
          _
        %v477 = vld [vmem:[%s456] sm:$0x1]
        %v478 = vlaneseq
        %v479 = vshrl.u32 %v478, 7
        %v480 = vadd.s32 %v479, 8
        %v481 = vadd.s32 %v479, 16
        %v482 = vadd.s32 %v479, 24
        %v483 = vlaneseq
        %v484 = vshrl.u32 %v483, 7
        %v485 = vsub.s32 0, %v484
        %v486 = vrot.slane %v477, %v485
        %vm487 = vcmp.eq.s32.totalorder %v479, %v486
        %vm488 = vcmp.eq.s32.totalorder %v480, %v486
        %vm489 = vcmp.eq.s32.totalorder %v481, %v486
        %vm490 = vcmp.eq.s32.totalorder %v482, %v486
        %v491 = vsel %vm487, 1, 0
        %v492 = vsel %vm488, 1, 0
        %v493 = vsel %vm489, 1, 0
        %v494 = vsel %vm490, 1, 0
        %v495 = vcvt.s32.f32 %v491
        %v496 = vcvt.s32.f32 %v492
        %v497 = vcvt.s32.f32 %v493
        %v498 = vcvt.s32.f32 %v494
        %v499 = vld [vmem:[%s2] sm:$0xff]
        %v500 = vld [vmem:[%s2 + $0x8] sm:$0xff]
        %v501 = vld [vmem:[%s3] sm:$0xff]
        %v502 = vld [vmem:[%s3 + $0x8] sm:$0xff]
        %504 = vset.pattern.permute.xlu0 0
        %505 = vperm.xlu0 %504, %v501
        %v506 = vpop.permute.xlu0 %505
        %509 = vset.pattern.permute.xlu0 0
        %510 = vperm.xlu0 %509, %v502
        %v511 = vpop.permute.xlu0 %510
        %vm513 = vcmask 261120
        %v515 = vsel %vm513, %v499, 0
        %v518 = vsel %vm513, %v500, 0
        %520 = vmatprep.subr.mxu0 0.0
        %521 = vmatpush1.msra.mxu0 %v495
        %522 = vmatprep.subr.mxu0 0.0
        %523 = vmatpush1.msra.mxu0 %v496
        %524 = vmatprep.subr.mxu0 0.0
        %525 = vmatpush1.msra.mxu0 %v497
        %526 = vmatprep.subr.mxu0 0.0
        %527 = vmatpush1.msra.mxu0 %v498
        %528 = vmatprep.subr.mxu0 0.0
        %529 = vmatpush1.msra.mxu0 0.0
        %530 = vmatprep.subr.mxu0 0.0
        %531 = vmatpush1.msra.mxu0 0.0
        %532 = vmatprep.subr.mxu0 0.0
        %533 = vmatpush1.msra.mxu0 0.0
        %534 = vmatprep.subr.mxu0 0.0
        %535 = vmatpush1.msra.mxu0 0.0
        %536 = vmatprep.subr.mxu0 0.0
        %537 = vmatpush1.msra.mxu0 0.0
        %538 = vmatprep.subr.mxu0 0.0
        %539 = vmatpush1.msra.mxu0 0.0
        %540 = vmatprep.subr.mxu0 0.0
        %541 = vmatpush1.msra.mxu0 0.0
        %542 = vmatprep.subr.mxu0 0.0
        %543 = vmatpush1.msra.mxu0 0.0
        %544 = vmatprep.subr.mxu0 0.0
        %545 = vmatpush1.msra.mxu0 0.0
        %546 = vmatprep.subr.mxu0 0.0
        %547 = vmatpush1.msra.mxu0 0.0
        %548 = vmatprep.subr.mxu0 0.0
        %549 = vmatpush1.msra.mxu0 0.0
        %550 = vmatprep.subr.mxu0 0.0
        %551 = vmatpush1.msra.mxu0 0.0
        %552 = vmatprep.subr.mxu0 0.0
        %553 = vmatpush1.msra.mxu0 0.0
        %554 = vmatprep.subr.mxu0 0.0
        %555 = vmatpush1.msra.mxu0 0.0
        %556 = vmatprep.subr.mxu0 0.0
        %557 = vmatpush1.msra.mxu0 0.0
        %558 = vmatprep.subr.mxu0 0.0
        %559 = vmatpush1.msra.mxu0 0.0
        %560 = vmatprep.subr.mxu0 0.0
        %561 = vmatpush1.msra.mxu0 0.0
        %562 = vmatprep.subr.mxu0 0.0
        %563 = vmatpush1.msra.mxu0 0.0
        %564 = vmatprep.subr.mxu0 0.0
        %565 = vmatpush1.msra.mxu0 0.0
        %566 = vmatprep.subr.mxu0 0.0
        %567 = vmatpush1.msra.mxu0 0.0
        %568 = vmatprep.subr.mxu0 0.0
        %569 = vmatpush1.msra.mxu0 0.0
        %570 = vmatprep.subr.mxu0 0.0
        %571 = vmatpush1.msra.mxu0 0.0
        %572 = vmatprep.subr.mxu0 0.0
        %573 = vmatpush1.msra.mxu0 0.0
        %574 = vmatprep.subr.mxu0 0.0
        %575 = vmatpush1.msra.mxu0 0.0
        %576 = vmatprep.subr.mxu0 0.0
        %577 = vmatpush1.msra.mxu0 0.0
        %578 = vmatprep.subr.mxu0 0.0
        %579 = vmatpush1.msra.mxu0 0.0
        %580 = vmatprep.subr.mxu0 0.0
        %581 = vmatpush1.msra.mxu0 0.0
        %582 = vmatprep.subr.mxu0 0.0
        %583 = vmatpush1.msra.mxu0 0.0
        %584 = vmatprep.mubr.f32.mxu0 0.0
        %585 = vmatmul.mubr.f32.gmra.mrb[0].mxu0 %v515
        %v586 = vpop.f32.mrb[0].mxu0
        %v587 = vadd.f32 %v506, %v586
        %v588 = vpop.f32.mrb[0].mxu0
        %589 = vmatprep.mubr.f32.mxu0 0.0
        %590 = vmatmul.mubr.f32.gmra.mrb[0].mxu0 %v518
        %v591 = vpop.f32.mrb[0].mxu0
        %v592 = vadd.f32 %v511, %v591
        %v593 = vpop.f32.mrb[0].mxu0
        %594 = vdwg.mxu0
        %v595 = vld [vmem:[%s464] sm:$0xff]
        %v596 = vlaneseq
        %v597 = vand.u32 %v596, 127
        %vm598 = vcmp.ge.s32.totalorder %v597, 1
        %v599 = vsel %vm598, 1, 0
        %vm600 = vcmp.eq.s32.totalorder %v599, 1
        %vm601 = vcmp.ge.s32.totalorder %v597, 2
        %v602 = vsel %vm601, 1, 0
        %vm603 = vcmp.eq.s32.totalorder %v602, 1
        %v604 = vld [vmem:[#allocation2] sm:$0xff]
        %v605 = vld [vmem:[#allocation2 + $0x8] sm:$0xff]
        %606 = vst [vmem:[#allocation2] sm:$0xff] %v587
        %607 = vst [vmem:[#allocation2 + $0x8] sm:$0xff] %v592
        %608 = vrot.lane.b32.xlu0 %v587, 1
        %v609 = vpop.permute.xlu0 %608
        %610 = vrot.lane.b32.xlu0 %v592, 1
        %v611 = vpop.permute.xlu0 %610
        %612 = vrot.lane.b32.xlu0 %v604, 1
        %v613 = vpop.permute.xlu0 %612
        %614 = vrot.lane.b32.xlu0 %v605, 1
        %v615 = vpop.permute.xlu0 %614
        %v616 = vsel %vm600, %v609, %v613
        %v617 = vsel %vm600, %v611, %v615
        %v618 = vld [vmem:[%s4] sm:$0xff]
        %v619 = vld [vmem:[%s4 + $0x8] sm:$0xff]
        %v620 = vld [vmem:[%s4 + $0x10] sm:$0xff]
        %v621 = vld [vmem:[%s4 + $0x18] sm:$0xff]
        %v622 = vld [vmem:[%s5] sm:$0xff]
        %v623 = vld [vmem:[%s5 + $0x8] sm:$0xff]
        %v624 = vld [vmem:[%s5 + $0x10] sm:$0xff]
        %v625 = vld [vmem:[%s5 + $0x18] sm:$0xff]
        %627 = vset.pattern.permute.xlu0 0
        %628 = vperm.xlu0 %627, %v622
        %v629 = vpop.permute.xlu0 %628
        %632 = vset.pattern.permute.xlu0 0
        %633 = vperm.xlu0 %632, %v623
        %v634 = vpop.permute.xlu0 %633
        %637 = vset.pattern.permute.xlu0 0
        %638 = vperm.xlu0 %637, %v624
        %v639 = vpop.permute.xlu0 %638
        %642 = vset.pattern.permute.xlu0 0
        %643 = vperm.xlu0 %642, %v625
        %v644 = vpop.permute.xlu0 %643
        %vm646 = vcmask 326656
        %v648 = vsel %vm646, %v618, 0
        %v651 = vsel %vm646, %v619, 0
        %v654 = vsel %vm646, %v620, 0
        %v657 = vsel %vm646, %v621, 0
        %659 = vmatprep.subr.mxu0 0.0
        %660 = vmatpush1.msra.mxu0 %v587
        %661 = vmatprep.subr.mxu0 0.0
        %662 = vmatpush1.msra.mxu0 %v592
        %663 = vmatprep.subr.mxu0 0.0
        %664 = vmatpush1.msra.mxu0 %v616
        %665 = vmatprep.subr.mxu0 0.0
        %666 = vmatpush1.msra.mxu0 %v617
        %667 = vmatprep.subr.mxu0 0.0
        %668 = vmatpush1.msra.mxu0 %v595
        %669 = vmatprep.subr.mxu0 0.0
        %670 = vmatpush1.msra.mxu0 0.0
        %671 = vmatprep.subr.mxu0 0.0
        %672 = vmatpush1.msra.mxu0 0.0
        %673 = vmatprep.subr.mxu0 0.0
        %674 = vmatpush1.msra.mxu0 0.0
        %675 = vmatprep.subr.mxu0 0.0
        %676 = vmatpush1.msra.mxu0 0.0
        %677 = vmatprep.subr.mxu0 0.0
        %678 = vmatpush1.msra.mxu0 0.0
        %679 = vmatprep.subr.mxu0 0.0
        %680 = vmatpush1.msra.mxu0 0.0
        %681 = vmatprep.subr.mxu0 0.0
        %682 = vmatpush1.msra.mxu0 0.0
        %683 = vmatprep.subr.mxu0 0.0
        %684 = vmatpush1.msra.mxu0 0.0
        %685 = vmatprep.subr.mxu0 0.0
        %686 = vmatpush1.msra.mxu0 0.0
        %687 = vmatprep.subr.mxu0 0.0
        %688 = vmatpush1.msra.mxu0 0.0
        %689 = vmatprep.subr.mxu0 0.0
        %690 = vmatpush1.msra.mxu0 0.0
        %691 = vmatprep.subr.mxu0 0.0
        %692 = vmatpush1.msra.mxu0 0.0
        %693 = vmatprep.subr.mxu0 0.0
        %694 = vmatpush1.msra.mxu0 0.0
        %695 = vmatprep.subr.mxu0 0.0
        %696 = vmatpush1.msra.mxu0 0.0
        %697 = vmatprep.subr.mxu0 0.0
        %698 = vmatpush1.msra.mxu0 0.0
        %699 = vmatprep.subr.mxu0 0.0
        %700 = vmatpush1.msra.mxu0 0.0
        %701 = vmatprep.subr.mxu0 0.0
        %702 = vmatpush1.msra.mxu0 0.0
        %703 = vmatprep.subr.mxu0 0.0
        %704 = vmatpush1.msra.mxu0 0.0
        %705 = vmatprep.subr.mxu0 0.0
        %706 = vmatpush1.msra.mxu0 0.0
        %707 = vmatprep.subr.mxu0 0.0
        %708 = vmatpush1.msra.mxu0 0.0
        %709 = vmatprep.subr.mxu0 0.0
        %710 = vmatpush1.msra.mxu0 0.0
        %711 = vmatprep.subr.mxu0 0.0
        %712 = vmatpush1.msra.mxu0 0.0
        %713 = vmatprep.subr.mxu0 0.0
        %714 = vmatpush1.msra.mxu0 0.0
        %715 = vmatprep.subr.mxu0 0.0
        %716 = vmatpush1.msra.mxu0 0.0
        %717 = vmatprep.subr.mxu0 0.0
        %718 = vmatpush1.msra.mxu0 0.0
        %719 = vmatprep.subr.mxu0 0.0
        %720 = vmatpush1.msra.mxu0 0.0
        %721 = vmatprep.subr.mxu0 0.0
        %722 = vmatpush1.msra.mxu0 0.0
        %723 = vmatprep.mubr.f32.mxu0 0.0
        %724 = vmatmul.mubr.f32.gmra.mrb[0].mxu0 %v648
        %v725 = vpop.f32.mrb[0].mxu0
        %v726 = vadd.f32 %v629, %v725
        %v727 = vpop.f32.mrb[0].mxu0
        %728 = vmatprep.mubr.f32.mxu0 0.0
        %729 = vmatmul.mubr.f32.gmra.mrb[0].mxu0 %v651
        %v730 = vpop.f32.mrb[0].mxu0
        %v731 = vadd.f32 %v634, %v730
        %v732 = vpop.f32.mrb[0].mxu0
        %733 = vmatprep.mubr.f32.mxu0 0.0
        %734 = vmatmul.mubr.f32.gmra.mrb[0].mxu0 %v654
        %v735 = vpop.f32.mrb[0].mxu0
        %v736 = vadd.f32 %v639, %v735
        %v737 = vpop.f32.mrb[0].mxu0
        %738 = vmatprep.mubr.f32.mxu0 0.0
        %739 = vmatmul.mubr.f32.gmra.mrb[0].mxu0 %v657
        %v740 = vpop.f32.mrb[0].mxu0
        %v741 = vadd.f32 %v644, %v740
        %v742 = vpop.f32.mrb[0].mxu0
        %743 = vdwg.mxu0
        %v744 = vtanh.pop %v726
        %v745 = vtanh.pop %v731
        %v746 = vxor.u32 %v736, 2147483648
        %v747 = vxor.u32 %v741, 2147483648
        %v748 = vmul.f32 %v746, 1.442695
        %v749 = vpow.pop %v748
        %v750 = vmul.f32 %v747, 1.442695
        %v751 = vpow.pop %v750
        %v752 = vadd.f32 %v749, 1.0
        %v753 = vadd.f32 %v751, 1.0
        %v754 = vrcp.pop %v752
        %v755 = vmul.f32 1.0, %v754
        %v756 = vrcp.pop %v753
        %v757 = vmul.f32 1.0, %v756
        %v758 = vmul.f32 %v744, %v755
        %v759 = vmul.f32 %v745, %v757
        %v760 = vld [vmem:[%s6] sm:$0xff]
        %v761 = vld [vmem:[%s6 + $0x8] sm:$0xff]
        %v762 = vld [vmem:[%s6 + $0x10] sm:$0xff]
        %v763 = vld [vmem:[%s6 + $0x18] sm:$0xff]
        %v764 = vld [vmem:[%s7] sm:$0xff]
        %v765 = vld [vmem:[%s7 + $0x8] sm:$0xff]
        %v766 = vld [vmem:[%s7 + $0x10] sm:$0xff]
        %v767 = vld [vmem:[%s7 + $0x18] sm:$0xff]
        %769 = vset.pattern.permute.xlu0 0
        %770 = vperm.xlu0 %769, %v764
        %v771 = vpop.permute.xlu0 %770
        %774 = vset.pattern.permute.xlu0 0
        %775 = vperm.xlu0 %774, %v765
        %v776 = vpop.permute.xlu0 %775
        %779 = vset.pattern.permute.xlu0 0
        %780 = vperm.xlu0 %779, %v766
        %v781 = vpop.permute.xlu0 %780
        %784 = vset.pattern.permute.xlu0 0
        %785 = vperm.xlu0 %784, %v767
        %v786 = vpop.permute.xlu0 %785
        %vm788 = vcmask 130048
        %v790 = vsel %vm788, %v760, 0
        %v793 = vsel %vm788, %v761, 0
        %v796 = vsel %vm788, %v762, 0
        %v799 = vsel %vm788, %v763, 0
        %801 = vmatprep.subr.mxu0 0.0
        %802 = vmatpush1.msra.mxu0 %v758
        %803 = vmatprep.subr.mxu0 0.0
        %804 = vmatpush1.msra.mxu0 %v759
        %805 = vmatprep.subr.mxu0 0.0
        %806 = vmatpush1.msra.mxu0 0.0
        %807 = vmatprep.subr.mxu0 0.0
        %808 = vmatpush1.msra.mxu0 0.0
        %809 = vmatprep.subr.mxu0 0.0
        %810 = vmatpush1.msra.mxu0 0.0
        %811 = vmatprep.subr.mxu0 0.0
        %812 = vmatpush1.msra.mxu0 0.0
        %813 = vmatprep.subr.mxu0 0.0
        %814 = vmatpush1.msra.mxu0 0.0
        %815 = vmatprep.subr.mxu0 0.0
        %816 = vmatpush1.msra.mxu0 0.0
        %817 = vmatprep.subr.mxu0 0.0
        %818 = vmatpush1.msra.mxu0 0.0
        %819 = vmatprep.subr.mxu0 0.0
        %820 = vmatpush1.msra.mxu0 0.0
        %821 = vmatprep.subr.mxu0 0.0
        %822 = vmatpush1.msra.mxu0 0.0
        %823 = vmatprep.subr.mxu0 0.0
        %824 = vmatpush1.msra.mxu0 0.0
        %825 = vmatprep.subr.mxu0 0.0
        %826 = vmatpush1.msra.mxu0 0.0
        %827 = vmatprep.subr.mxu0 0.0
        %828 = vmatpush1.msra.mxu0 0.0
        %829 = vmatprep.subr.mxu0 0.0
        %830 = vmatpush1.msra.mxu0 0.0
        %831 = vmatprep.subr.mxu0 0.0
        %832 = vmatpush1.msra.mxu0 0.0
        %833 = vmatprep.subr.mxu0 0.0
        %834 = vmatpush1.msra.mxu0 0.0
        %835 = vmatprep.subr.mxu0 0.0
        %836 = vmatpush1.msra.mxu0 0.0
        %837 = vmatprep.subr.mxu0 0.0
        %838 = vmatpush1.msra.mxu0 0.0
        %839 = vmatprep.subr.mxu0 0.0
        %840 = vmatpush1.msra.mxu0 0.0
        %841 = vmatprep.subr.mxu0 0.0
        %842 = vmatpush1.msra.mxu0 0.0
        %843 = vmatprep.subr.mxu0 0.0
        %844 = vmatpush1.msra.mxu0 0.0
        %845 = vmatprep.subr.mxu0 0.0
        %846 = vmatpush1.msra.mxu0 0.0
        %847 = vmatprep.subr.mxu0 0.0
        %848 = vmatpush1.msra.mxu0 0.0
        %849 = vmatprep.subr.mxu0 0.0
        %850 = vmatpush1.msra.mxu0 0.0
        %851 = vmatprep.subr.mxu0 0.0
        %852 = vmatpush1.msra.mxu0 0.0
        %853 = vmatprep.subr.mxu0 0.0
        %854 = vmatpush1.msra.mxu0 0.0
        %855 = vmatprep.subr.mxu0 0.0
        %856 = vmatpush1.msra.mxu0 0.0
        %857 = vmatprep.subr.mxu0 0.0
        %858 = vmatpush1.msra.mxu0 0.0
        %859 = vmatprep.subr.mxu0 0.0
        %860 = vmatpush1.msra.mxu0 0.0
        %861 = vmatprep.subr.mxu0 0.0
        %862 = vmatpush1.msra.mxu0 0.0
        %863 = vmatprep.subr.mxu0 0.0
        %864 = vmatpush1.msra.mxu0 0.0
        %865 = vmatprep.mubr.f32.mxu0 0.0
        %866 = vmatmul.mubr.f32.gmra.mrb[0].mxu0 %v790
        %v867 = vpop.f32.mrb[0].mxu0
        %v868 = vadd.f32 %v771, %v867
        %v869 = vpop.f32.mrb[0].mxu0
        %870 = vmatprep.mubr.f32.mxu0 0.0
        %871 = vmatmul.mubr.f32.gmra.mrb[0].mxu0 %v793
        %v872 = vpop.f32.mrb[0].mxu0
        %v873 = vadd.f32 %v776, %v872
        %v874 = vpop.f32.mrb[0].mxu0
        %875 = vmatprep.mubr.f32.mxu0 0.0
        %876 = vmatmul.mubr.f32.gmra.mrb[0].mxu0 %v796
        %v877 = vpop.f32.mrb[0].mxu0
        %v878 = vadd.f32 %v781, %v877
        %v879 = vpop.f32.mrb[0].mxu0
        %880 = vmatprep.mubr.f32.mxu0 0.0
        %881 = vmatmul.mubr.f32.gmra.mrb[0].mxu0 %v799
        %v882 = vpop.f32.mrb[0].mxu0
        %v883 = vadd.f32 %v786, %v882
        %v884 = vpop.f32.mrb[0].mxu0
        %885 = vdwg.mxu0
        %v886 = vadd.f32 %v868, 0.0
        %v887 = vadd.f32 %v873, 0.0
        %v888 = vadd.f32 %v878, %v587
        %v889 = vadd.f32 %v883, %v592
        %s890 = scalar_lea.vmem [#allocation2], 16
        %v891 = vld [vmem:[%s890] sm:$0xff]
        %v892 = vld [vmem:[%s890 + $0x8] sm:$0xff]
        %893 = vst [vmem:[%s890] sm:$0xff] %v888
        %894 = vst [vmem:[%s890 + $0x8] sm:$0xff] %v889
        %895 = vrot.lane.b32.xlu0 %v888, 2
        %v896 = vpop.permute.xlu0 %895
        %897 = vrot.lane.b32.xlu0 %v889, 2
        %v898 = vpop.permute.xlu0 %897
        %899 = vrot.lane.b32.xlu0 %v891, 2
        %v900 = vpop.permute.xlu0 %899
        %901 = vrot.lane.b32.xlu0 %v892, 2
        %v902 = vpop.permute.xlu0 %901
        %v903 = vsel %vm603, %v896, %v900
        %v904 = vsel %vm603, %v898, %v902
        %s905 = scalar_lea.vmem %s4, 32
        %v906 = vld [vmem:[%s905] sm:$0xff]
        %v907 = vld [vmem:[%s905 + $0x8] sm:$0xff]
        %v908 = vld [vmem:[%s905 + $0x10] sm:$0xff]
        %v909 = vld [vmem:[%s905 + $0x18] sm:$0xff]
        %s910 = scalar_lea.vmem %s5, 32
        %v911 = vld [vmem:[%s910] sm:$0xff]
        %v912 = vld [vmem:[%s910 + $0x8] sm:$0xff]
        %v913 = vld [vmem:[%s910 + $0x10] sm:$0xff]
        %v914 = vld [vmem:[%s910 + $0x18] sm:$0xff]
        %916 = vset.pattern.permute.xlu0 0
        %917 = vperm.xlu0 %916, %v911
        %v918 = vpop.permute.xlu0 %917
        %921 = vset.pattern.permute.xlu0 0
        %922 = vperm.xlu0 %921, %v912
        %v923 = vpop.permute.xlu0 %922
        %926 = vset.pattern.permute.xlu0 0
        %927 = vperm.xlu0 %926, %v913
        %v928 = vpop.permute.xlu0 %927
        %931 = vset.pattern.permute.xlu0 0
        %932 = vperm.xlu0 %931, %v914
        %v933 = vpop.permute.xlu0 %932
        %v936 = vsel %vm646, %v906, 0
        %v939 = vsel %vm646, %v907, 0
        %v942 = vsel %vm646, %v908, 0
        %v945 = vsel %vm646, %v909, 0
        %947 = vmatprep.subr.mxu0 0.0
        %948 = vmatpush1.msra.mxu0 %v888
        %949 = vmatprep.subr.mxu0 0.0
        %950 = vmatpush1.msra.mxu0 %v889
        %951 = vmatprep.subr.mxu0 0.0
        %952 = vmatpush1.msra.mxu0 %v903
        %953 = vmatprep.subr.mxu0 0.0
        %954 = vmatpush1.msra.mxu0 %v904
        %955 = vmatprep.subr.mxu0 0.0
        %956 = vmatpush1.msra.mxu0 %v595
        %957 = vmatprep.subr.mxu0 0.0
        %958 = vmatpush1.msra.mxu0 0.0
        %959 = vmatprep.subr.mxu0 0.0
        %960 = vmatpush1.msra.mxu0 0.0
        %961 = vmatprep.subr.mxu0 0.0
        %962 = vmatpush1.msra.mxu0 0.0
        %963 = vmatprep.subr.mxu0 0.0
        %964 = vmatpush1.msra.mxu0 0.0
        %965 = vmatprep.subr.mxu0 0.0
        %966 = vmatpush1.msra.mxu0 0.0
        %967 = vmatprep.subr.mxu0 0.0
        %968 = vmatpush1.msra.mxu0 0.0
        %969 = vmatprep.subr.mxu0 0.0
        %970 = vmatpush1.msra.mxu0 0.0
        %971 = vmatprep.subr.mxu0 0.0
        %972 = vmatpush1.msra.mxu0 0.0
        %973 = vmatprep.subr.mxu0 0.0
        %974 = vmatpush1.msra.mxu0 0.0
        %975 = vmatprep.subr.mxu0 0.0
        %976 = vmatpush1.msra.mxu0 0.0
        %977 = vmatprep.subr.mxu0 0.0
        %978 = vmatpush1.msra.mxu0 0.0
        %979 = vmatprep.subr.mxu0 0.0
        %980 = vmatpush1.msra.mxu0 0.0
        %981 = vmatprep.subr.mxu0 0.0
        %982 = vmatpush1.msra.mxu0 0.0
        %983 = vmatprep.subr.mxu0 0.0
        %984 = vmatpush1.msra.mxu0 0.0
        %985 = vmatprep.subr.mxu0 0.0
        %986 = vmatpush1.msra.mxu0 0.0
        %987 = vmatprep.subr.mxu0 0.0
        %988 = vmatpush1.msra.mxu0 0.0
        %989 = vmatprep.subr.mxu0 0.0
        %990 = vmatpush1.msra.mxu0 0.0
        %991 = vmatprep.subr.mxu0 0.0
        %992 = vmatpush1.msra.mxu0 0.0
        %993 = vmatprep.subr.mxu0 0.0
        %994 = vmatpush1.msra.mxu0 0.0
        %995 = vmatprep.subr.mxu0 0.0
        %996 = vmatpush1.msra.mxu0 0.0
        %997 = vmatprep.subr.mxu0 0.0
        %998 = vmatpush1.msra.mxu0 0.0
        %999 = vmatprep.subr.mxu0 0.0
        %1000 = vmatpush1.msra.mxu0 0.0
        %1001 = vmatprep.subr.mxu0 0.0
        %1002 = vmatpush1.msra.mxu0 0.0
        %1003 = vmatprep.subr.mxu0 0.0
        %1004 = vmatpush1.msra.mxu0 0.0
        %1005 = vmatprep.subr.mxu0 0.0
        %1006 = vmatpush1.msra.mxu0 0.0
        %1007 = vmatprep.subr.mxu0 0.0
        %1008 = vmatpush1.msra.mxu0 0.0
        %1009 = vmatprep.subr.mxu0 0.0
        %1010 = vmatpush1.msra.mxu0 0.0
        %1011 = vmatprep.mubr.f32.mxu0 0.0
        %1012 = vmatmul.mubr.f32.gmra.mrb[0].mxu0 %v936
        %v1013 = vpop.f32.mrb[0].mxu0
        %v1014 = vadd.f32 %v918, %v1013
        %v1015 = vpop.f32.mrb[0].mxu0
        %1016 = vmatprep.mubr.f32.mxu0 0.0
        %1017 = vmatmul.mubr.f32.gmra.mrb[0].mxu0 %v939
        %v1018 = vpop.f32.mrb[0].mxu0
        %v1019 = vadd.f32 %v923, %v1018
        %v1020 = vpop.f32.mrb[0].mxu0
        %1021 = vmatprep.mubr.f32.mxu0 0.0
        %1022 = vmatmul.mubr.f32.gmra.mrb[0].mxu0 %v942
        %v1023 = vpop.f32.mrb[0].mxu0
        %v1024 = vadd.f32 %v928, %v1023
        %v1025 = vpop.f32.mrb[0].mxu0
        %1026 = vmatprep.mubr.f32.mxu0 0.0
        %1027 = vmatmul.mubr.f32.gmra.mrb[0].mxu0 %v945
        %v1028 = vpop.f32.mrb[0].mxu0
        %v1029 = vadd.f32 %v933, %v1028
        %v1030 = vpop.f32.mrb[0].mxu0
        %1031 = vdwg.mxu0
        %v1032 = vtanh.pop %v1014
        %v1033 = vtanh.pop %v1019
        %v1034 = vxor.u32 %v1024, 2147483648
        %v1035 = vxor.u32 %v1029, 2147483648
        %v1036 = vmul.f32 %v1034, 1.442695
        %v1037 = vpow.pop %v1036
        %v1038 = vmul.f32 %v1035, 1.442695
        %v1039 = vpow.pop %v1038
        %v1040 = vadd.f32 %v1037, 1.0
        %v1041 = vadd.f32 %v1039, 1.0
        %v1042 = vrcp.pop %v1040
        %v1043 = vmul.f32 1.0, %v1042
        %v1044 = vrcp.pop %v1041
        %v1045 = vmul.f32 1.0, %v1044
        %v1046 = vmul.f32 %v1032, %v1043
        %v1047 = vmul.f32 %v1033, %v1045
        %s1048 = scalar_lea.vmem %s6, 32
        %v1049 = vld [vmem:[%s1048] sm:$0xff]
        %v1050 = vld [vmem:[%s1048 + $0x8] sm:$0xff]
        %v1051 = vld [vmem:[%s1048 + $0x10] sm:$0xff]
        %v1052 = vld [vmem:[%s1048 + $0x18] sm:$0xff]
        %s1053 = scalar_lea.vmem %s7, 32
        %v1054 = vld [vmem:[%s1053] sm:$0xff]
        %v1055 = vld [vmem:[%s1053 + $0x8] sm:$0xff]
        %v1056 = vld [vmem:[%s1053 + $0x10] sm:$0xff]
        %v1057 = vld [vmem:[%s1053 + $0x18] sm:$0xff]
        %1059 = vset.pattern.permute.xlu0 0
        %1060 = vperm.xlu0 %1059, %v1054
        %v1061 = vpop.permute.xlu0 %1060
        %1064 = vset.pattern.permute.xlu0 0
        %1065 = vperm.xlu0 %1064, %v1055
        %v1066 = vpop.permute.xlu0 %1065
        %1069 = vset.pattern.permute.xlu0 0
        %1070 = vperm.xlu0 %1069, %v1056
        %v1071 = vpop.permute.xlu0 %1070
        %1074 = vset.pattern.permute.xlu0 0
        %1075 = vperm.xlu0 %1074, %v1057
        %v1076 = vpop.permute.xlu0 %1075
        %v1079 = vsel %vm788, %v1049, 0
        %v1082 = vsel %vm788, %v1050, 0
        %v1085 = vsel %vm788, %v1051, 0
        %v1088 = vsel %vm788, %v1052, 0
        %1090 = vmatprep.subr.mxu0 0.0
        %1091 = vmatpush1.msra.mxu0 %v1046
        %1092 = vmatprep.subr.mxu0 0.0
        %1093 = vmatpush1.msra.mxu0 %v1047
        %1094 = vmatprep.subr.mxu0 0.0
        %1095 = vmatpush1.msra.mxu0 0.0
        %1096 = vmatprep.subr.mxu0 0.0
        %1097 = vmatpush1.msra.mxu0 0.0
        %1098 = vmatprep.subr.mxu0 0.0
        %1099 = vmatpush1.msra.mxu0 0.0
        %1100 = vmatprep.subr.mxu0 0.0
        %1101 = vmatpush1.msra.mxu0 0.0
        %1102 = vmatprep.subr.mxu0 0.0
        %1103 = vmatpush1.msra.mxu0 0.0
        %1104 = vmatprep.subr.mxu0 0.0
        %1105 = vmatpush1.msra.mxu0 0.0
        %1106 = vmatprep.subr.mxu0 0.0
        %1107 = vmatpush1.msra.mxu0 0.0
        %1108 = vmatprep.subr.mxu0 0.0
        %1109 = vmatpush1.msra.mxu0 0.0
        %1110 = vmatprep.subr.mxu0 0.0
        %1111 = vmatpush1.msra.mxu0 0.0
        %1112 = vmatprep.subr.mxu0 0.0
        %1113 = vmatpush1.msra.mxu0 0.0
        %1114 = vmatprep.subr.mxu0 0.0
        %1115 = vmatpush1.msra.mxu0 0.0
        %1116 = vmatprep.subr.mxu0 0.0
        %1117 = vmatpush1.msra.mxu0 0.0
        %1118 = vmatprep.subr.mxu0 0.0
        %1119 = vmatpush1.msra.mxu0 0.0
        %1120 = vmatprep.subr.mxu0 0.0
        %1121 = vmatpush1.msra.mxu0 0.0
        %1122 = vmatprep.subr.mxu0 0.0
        %1123 = vmatpush1.msra.mxu0 0.0
        %1124 = vmatprep.subr.mxu0 0.0
        %1125 = vmatpush1.msra.mxu0 0.0
        %1126 = vmatprep.subr.mxu0 0.0
        %1127 = vmatpush1.msra.mxu0 0.0
        %1128 = vmatprep.subr.mxu0 0.0
        %1129 = vmatpush1.msra.mxu0 0.0
        %1130 = vmatprep.subr.mxu0 0.0
        %1131 = vmatpush1.msra.mxu0 0.0
        %1132 = vmatprep.subr.mxu0 0.0
        %1133 = vmatpush1.msra.mxu0 0.0
        %1134 = vmatprep.subr.mxu0 0.0
        %1135 = vmatpush1.msra.mxu0 0.0
        %1136 = vmatprep.subr.mxu0 0.0
        %1137 = vmatpush1.msra.mxu0 0.0
        %1138 = vmatprep.subr.mxu0 0.0
        %1139 = vmatpush1.msra.mxu0 0.0
        %1140 = vmatprep.subr.mxu0 0.0
        %1141 = vmatpush1.msra.mxu0 0.0
        %1142 = vmatprep.subr.mxu0 0.0
        %1143 = vmatpush1.msra.mxu0 0.0
        %1144 = vmatprep.subr.mxu0 0.0
        %1145 = vmatpush1.msra.mxu0 0.0
        %1146 = vmatprep.subr.mxu0 0.0
        %1147 = vmatpush1.msra.mxu0 0.0
        %1148 = vmatprep.subr.mxu0 0.0
        %1149 = vmatpush1.msra.mxu0 0.0
        %1150 = vmatprep.subr.mxu0 0.0
        %1151 = vmatpush1.msra.mxu0 0.0
        %1152 = vmatprep.subr.mxu0 0.0
        %1153 = vmatpush1.msra.mxu0 0.0
        %1154 = vmatprep.mubr.f32.mxu0 0.0
        %1155 = vmatmul.mubr.f32.gmra.mrb[0].mxu0 %v1079
        %v1156 = vpop.f32.mrb[0].mxu0
        %v1157 = vadd.f32 %v1061, %v1156
        %v1158 = vpop.f32.mrb[0].mxu0
        %1159 = vmatprep.mubr.f32.mxu0 0.0
        %1160 = vmatmul.mubr.f32.gmra.mrb[0].mxu0 %v1082
        %v1161 = vpop.f32.mrb[0].mxu0
        %v1162 = vadd.f32 %v1066, %v1161
        %v1163 = vpop.f32.mrb[0].mxu0
        %1164 = vmatprep.mubr.f32.mxu0 0.0
        %1165 = vmatmul.mubr.f32.gmra.mrb[0].mxu0 %v1085
        %v1166 = vpop.f32.mrb[0].mxu0
        %v1167 = vadd.f32 %v1071, %v1166
        %v1168 = vpop.f32.mrb[0].mxu0
        %1169 = vmatprep.mubr.f32.mxu0 0.0
        %1170 = vmatmul.mubr.f32.gmra.mrb[0].mxu0 %v1088
        %v1171 = vpop.f32.mrb[0].mxu0
        %v1172 = vadd.f32 %v1076, %v1171
        %v1173 = vpop.f32.mrb[0].mxu0
        %1174 = vdwg.mxu0
        %v1175 = vadd.f32 %v886, %v1157
        %v1176 = vadd.f32 %v887, %v1162
        %v1177 = vadd.f32 %v1167, %v888
        %v1178 = vadd.f32 %v1172, %v889
        %s1179 = scalar_lea.vmem [#allocation2], 32
        %v1180 = vld [vmem:[%s1179] sm:$0xff]
        %v1181 = vld [vmem:[%s1179 + $0x8] sm:$0xff]
        %1182 = vst [vmem:[%s1179] sm:$0xff] %v1177
        %1183 = vst [vmem:[%s1179 + $0x8] sm:$0xff] %v1178
        %1184 = vrot.lane.b32.xlu0 %v1177, 1
        %v1185 = vpop.permute.xlu0 %1184
        %1186 = vrot.lane.b32.xlu0 %v1178, 1
        %v1187 = vpop.permute.xlu0 %1186
        %1188 = vrot.lane.b32.xlu0 %v1180, 1
        %v1189 = vpop.permute.xlu0 %1188
        %1190 = vrot.lane.b32.xlu0 %v1181, 1
        %v1191 = vpop.permute.xlu0 %1190
        %v1192 = vsel %vm600, %v1185, %v1189
        %v1193 = vsel %vm600, %v1187, %v1191
        %s1194 = scalar_lea.vmem %s4, 64
        %v1195 = vld [vmem:[%s1194] sm:$0xff]
        %v1196 = vld [vmem:[%s1194 + $0x8] sm:$0xff]
        %v1197 = vld [vmem:[%s1194 + $0x10] sm:$0xff]
        %v1198 = vld [vmem:[%s1194 + $0x18] sm:$0xff]
        %s1199 = scalar_lea.vmem %s5, 64
        %v1200 = vld [vmem:[%s1199] sm:$0xff]
        %v1201 = vld [vmem:[%s1199 + $0x8] sm:$0xff]
        %v1202 = vld [vmem:[%s1199 + $0x10] sm:$0xff]
        %v1203 = vld [vmem:[%s1199 + $0x18] sm:$0xff]
        %1205 = vset.pattern.permute.xlu0 0
        %1206 = vperm.xlu0 %1205, %v1200
        %v1207 = vpop.permute.xlu0 %1206
        %1210 = vset.pattern.permute.xlu0 0
        %1211 = vperm.xlu0 %1210, %v1201
        %v1212 = vpop.permute.xlu0 %1211
        %1215 = vset.pattern.permute.xlu0 0
        %1216 = vperm.xlu0 %1215, %v1202
        %v1217 = vpop.permute.xlu0 %1216
        %1220 = vset.pattern.permute.xlu0 0
        %1221 = vperm.xlu0 %1220, %v1203
        %v1222 = vpop.permute.xlu0 %1221
        %v1225 = vsel %vm646, %v1195, 0
        %v1228 = vsel %vm646, %v1196, 0
        %v1231 = vsel %vm646, %v1197, 0
        %v1234 = vsel %vm646, %v1198, 0
        %1236 = vmatprep.subr.mxu0 0.0
        %1237 = vmatpush1.msra.mxu0 %v1177
        %1238 = vmatprep.subr.mxu0 0.0
        %1239 = vmatpush1.msra.mxu0 %v1178
        %1240 = vmatprep.subr.mxu0 0.0
        %1241 = vmatpush1.msra.mxu0 %v1192
        %1242 = vmatprep.subr.mxu0 0.0
        %1243 = vmatpush1.msra.mxu0 %v1193
        %1244 = vmatprep.subr.mxu0 0.0
        %1245 = vmatpush1.msra.mxu0 %v595
        %1246 = vmatprep.subr.mxu0 0.0
        %1247 = vmatpush1.msra.mxu0 0.0
        %1248 = vmatprep.subr.mxu0 0.0
        %1249 = vmatpush1.msra.mxu0 0.0
        %1250 = vmatprep.subr.mxu0 0.0
        %1251 = vmatpush1.msra.mxu0 0.0
        %1252 = vmatprep.subr.mxu0 0.0
        %1253 = vmatpush1.msra.mxu0 0.0
        %1254 = vmatprep.subr.mxu0 0.0
        %1255 = vmatpush1.msra.mxu0 0.0
        %1256 = vmatprep.subr.mxu0 0.0
        %1257 = vmatpush1.msra.mxu0 0.0
        %1258 = vmatprep.subr.mxu0 0.0
        %1259 = vmatpush1.msra.mxu0 0.0
        %1260 = vmatprep.subr.mxu0 0.0
        %1261 = vmatpush1.msra.mxu0 0.0
        %1262 = vmatprep.subr.mxu0 0.0
        %1263 = vmatpush1.msra.mxu0 0.0
        %1264 = vmatprep.subr.mxu0 0.0
        %1265 = vmatpush1.msra.mxu0 0.0
        %1266 = vmatprep.subr.mxu0 0.0
        %1267 = vmatpush1.msra.mxu0 0.0
        %1268 = vmatprep.subr.mxu0 0.0
        %1269 = vmatpush1.msra.mxu0 0.0
        %1270 = vmatprep.subr.mxu0 0.0
        %1271 = vmatpush1.msra.mxu0 0.0
        %1272 = vmatprep.subr.mxu0 0.0
        %1273 = vmatpush1.msra.mxu0 0.0
        %1274 = vmatprep.subr.mxu0 0.0
        %1275 = vmatpush1.msra.mxu0 0.0
        %1276 = vmatprep.subr.mxu0 0.0
        %1277 = vmatpush1.msra.mxu0 0.0
        %1278 = vmatprep.subr.mxu0 0.0
        %1279 = vmatpush1.msra.mxu0 0.0
        %1280 = vmatprep.subr.mxu0 0.0
        %1281 = vmatpush1.msra.mxu0 0.0
        %1282 = vmatprep.subr.mxu0 0.0
        %1283 = vmatpush1.msra.mxu0 0.0
        %1284 = vmatprep.subr.mxu0 0.0
        %1285 = vmatpush1.msra.mxu0 0.0
        %1286 = vmatprep.subr.mxu0 0.0
        %1287 = vmatpush1.msra.mxu0 0.0
        %1288 = vmatprep.subr.mxu0 0.0
        %1289 = vmatpush1.msra.mxu0 0.0
        %1290 = vmatprep.subr.mxu0 0.0
        %1291 = vmatpush1.msra.mxu0 0.0
        %1292 = vmatprep.subr.mxu0 0.0
        %1293 = vmatpush1.msra.mxu0 0.0
        %1294 = vmatprep.subr.mxu0 0.0
        %1295 = vmatpush1.msra.mxu0 0.0
        %1296 = vmatprep.subr.mxu0 0.0
        %1297 = vmatpush1.msra.mxu0 0.0
        %1298 = vmatprep.subr.mxu0 0.0
        %1299 = vmatpush1.msra.mxu0 0.0
        %1300 = vmatprep.mubr.f32.mxu0 0.0
        %1301 = vmatmul.mubr.f32.gmra.mrb[0].mxu0 %v1225
        %v1302 = vpop.f32.mrb[0].mxu0
        %v1303 = vadd.f32 %v1207, %v1302
        %v1304 = vpop.f32.mrb[0].mxu0
        %1305 = vmatprep.mubr.f32.mxu0 0.0
        %1306 = vmatmul.mubr.f32.gmra.mrb[0].mxu0 %v1228
        %v1307 = vpop.f32.mrb[0].mxu0
        %v1308 = vadd.f32 %v1212, %v1307
        %v1309 = vpop.f32.mrb[0].mxu0
        %1310 = vmatprep.mubr.f32.mxu0 0.0
        %1311 = vmatmul.mubr.f32.gmra.mrb[0].mxu0 %v1231
        %v1312 = vpop.f32.mrb[0].mxu0
        %v1313 = vadd.f32 %v1217, %v1312
        %v1314 = vpop.f32.mrb[0].mxu0
        %1315 = vmatprep.mubr.f32.mxu0 0.0
        %1316 = vmatmul.mubr.f32.gmra.mrb[0].mxu0 %v1234
        %v1317 = vpop.f32.mrb[0].mxu0
        %v1318 = vadd.f32 %v1222, %v1317
        %v1319 = vpop.f32.mrb[0].mxu0
        %1320 = vdwg.mxu0
        %v1321 = vtanh.pop %v1303
        %v1322 = vtanh.pop %v1308
        %v1323 = vxor.u32 %v1313, 2147483648
        %v1324 = vxor.u32 %v1318, 2147483648
        %v1325 = vmul.f32 %v1323, 1.442695
        %v1326 = vpow.pop %v1325
        %v1327 = vmul.f32 %v1324, 1.442695
        %v1328 = vpow.pop %v1327
        %v1329 = vadd.f32 %v1326, 1.0
        %v1330 = vadd.f32 %v1328, 1.0
        %v1331 = vrcp.pop %v1329
        %v1332 = vmul.f32 1.0, %v1331
        %v1333 = vrcp.pop %v1330
        %v1334 = vmul.f32 1.0, %v1333
        %v1335 = vmul.f32 %v1321, %v1332
        %v1336 = vmul.f32 %v1322, %v1334
        %s1337 = scalar_lea.vmem %s6, 64
        %v1338 = vld [vmem:[%s1337] sm:$0xff]
        %v1339 = vld [vmem:[%s1337 + $0x8] sm:$0xff]
        %v1340 = vld [vmem:[%s1337 + $0x10] sm:$0xff]
        %v1341 = vld [vmem:[%s1337 + $0x18] sm:$0xff]
        %s1342 = scalar_lea.vmem %s7, 64
        %v1343 = vld [vmem:[%s1342] sm:$0xff]
        %v1344 = vld [vmem:[%s1342 + $0x8] sm:$0xff]
        %v1345 = vld [vmem:[%s1342 + $0x10] sm:$0xff]
        %v1346 = vld [vmem:[%s1342 + $0x18] sm:$0xff]
        %1348 = vset.pattern.permute.xlu0 0
        %1349 = vperm.xlu0 %1348, %v1343
        %v1350 = vpop.permute.xlu0 %1349
        %1353 = vset.pattern.permute.xlu0 0
        %1354 = vperm.xlu0 %1353, %v1344
        %v1355 = vpop.permute.xlu0 %1354
        %1358 = vset.pattern.permute.xlu0 0
        %1359 = vperm.xlu0 %1358, %v1345
        %v1360 = vpop.permute.xlu0 %1359
        %1363 = vset.pattern.permute.xlu0 0
        %1364 = vperm.xlu0 %1363, %v1346
        %v1365 = vpop.permute.xlu0 %1364
        %v1368 = vsel %vm788, %v1338, 0
        %v1371 = vsel %vm788, %v1339, 0
        %v1374 = vsel %vm788, %v1340, 0
        %v1377 = vsel %vm788, %v1341, 0
        %1379 = vmatprep.subr.mxu0 0.0
        %1380 = vmatpush1.msra.mxu0 %v1335
        %1381 = vmatprep.subr.mxu0 0.0
        %1382 = vmatpush1.msra.mxu0 %v1336
        %1383 = vmatprep.subr.mxu0 0.0
        %1384 = vmatpush1.msra.mxu0 0.0
        %1385 = vmatprep.subr.mxu0 0.0
        %1386 = vmatpush1.msra.mxu0 0.0
        %1387 = vmatprep.subr.mxu0 0.0
        %1388 = vmatpush1.msra.mxu0 0.0
        %1389 = vmatprep.subr.mxu0 0.0
        %1390 = vmatpush1.msra.mxu0 0.0
        %1391 = vmatprep.subr.mxu0 0.0
        %1392 = vmatpush1.msra.mxu0 0.0
        %1393 = vmatprep.subr.mxu0 0.0
        %1394 = vmatpush1.msra.mxu0 0.0
        %1395 = vmatprep.subr.mxu0 0.0
        %1396 = vmatpush1.msra.mxu0 0.0
        %1397 = vmatprep.subr.mxu0 0.0
        %1398 = vmatpush1.msra.mxu0 0.0
        %1399 = vmatprep.subr.mxu0 0.0
        %1400 = vmatpush1.msra.mxu0 0.0
        %1401 = vmatprep.subr.mxu0 0.0
        %1402 = vmatpush1.msra.mxu0 0.0
        %1403 = vmatprep.subr.mxu0 0.0
        %1404 = vmatpush1.msra.mxu0 0.0
        %1405 = vmatprep.subr.mxu0 0.0
        %1406 = vmatpush1.msra.mxu0 0.0
        %1407 = vmatprep.subr.mxu0 0.0
        %1408 = vmatpush1.msra.mxu0 0.0
        %1409 = vmatprep.subr.mxu0 0.0
        %1410 = vmatpush1.msra.mxu0 0.0
        %1411 = vmatprep.subr.mxu0 0.0
        %1412 = vmatpush1.msra.mxu0 0.0
        %1413 = vmatprep.subr.mxu0 0.0
        %1414 = vmatpush1.msra.mxu0 0.0
        %1415 = vmatprep.subr.mxu0 0.0
        %1416 = vmatpush1.msra.mxu0 0.0
        %1417 = vmatprep.subr.mxu0 0.0
        %1418 = vmatpush1.msra.mxu0 0.0
        %1419 = vmatprep.subr.mxu0 0.0
        %1420 = vmatpush1.msra.mxu0 0.0
        %1421 = vmatprep.subr.mxu0 0.0
        %1422 = vmatpush1.msra.mxu0 0.0
        %1423 = vmatprep.subr.mxu0 0.0
        %1424 = vmatpush1.msra.mxu0 0.0
        %1425 = vmatprep.subr.mxu0 0.0
        %1426 = vmatpush1.msra.mxu0 0.0
        %1427 = vmatprep.subr.mxu0 0.0
        %1428 = vmatpush1.msra.mxu0 0.0
        %1429 = vmatprep.subr.mxu0 0.0
        %1430 = vmatpush1.msra.mxu0 0.0
        %1431 = vmatprep.subr.mxu0 0.0
        %1432 = vmatpush1.msra.mxu0 0.0
        %1433 = vmatprep.subr.mxu0 0.0
        %1434 = vmatpush1.msra.mxu0 0.0
        %1435 = vmatprep.subr.mxu0 0.0
        %1436 = vmatpush1.msra.mxu0 0.0
        %1437 = vmatprep.subr.mxu0 0.0
        %1438 = vmatpush1.msra.mxu0 0.0
        %1439 = vmatprep.subr.mxu0 0.0
        %1440 = vmatpush1.msra.mxu0 0.0
        %1441 = vmatprep.subr.mxu0 0.0
        %1442 = vmatpush1.msra.mxu0 0.0
        %1443 = vmatprep.mubr.f32.mxu0 0.0
        %1444 = vmatmul.mubr.f32.gmra.mrb[0].mxu0 %v1368
        %v1445 = vpop.f32.mrb[0].mxu0
        %v1446 = vadd.f32 %v1350, %v1445
        %v1447 = vpop.f32.mrb[0].mxu0
        %1448 = vmatprep.mubr.f32.mxu0 0.0
        %1449 = vmatmul.mubr.f32.gmra.mrb[0].mxu0 %v1371
        %v1450 = vpop.f32.mrb[0].mxu0
        %v1451 = vadd.f32 %v1355, %v1450
        %v1452 = vpop.f32.mrb[0].mxu0
        %1453 = vmatprep.mubr.f32.mxu0 0.0
        %1454 = vmatmul.mubr.f32.gmra.mrb[0].mxu0 %v1374
        %v1455 = vpop.f32.mrb[0].mxu0
        %v1456 = vadd.f32 %v1360, %v1455
        %v1457 = vpop.f32.mrb[0].mxu0
        %1458 = vmatprep.mubr.f32.mxu0 0.0
        %1459 = vmatmul.mubr.f32.gmra.mrb[0].mxu0 %v1377
        %v1460 = vpop.f32.mrb[0].mxu0
        %v1461 = vadd.f32 %v1365, %v1460
        %v1462 = vpop.f32.mrb[0].mxu0
        %1463 = vdwg.mxu0
        %v1464 = vadd.f32 %v1175, %v1446
        %v1465 = vadd.f32 %v1176, %v1451
        %v1466 = vadd.f32 %v1456, %v1177
        %v1467 = vadd.f32 %v1461, %v1178
        %s1468 = scalar_lea.vmem [#allocation2], 48
        %v1469 = vld [vmem:[%s1468] sm:$0xff]
        %v1470 = vld [vmem:[%s1468 + $0x8] sm:$0xff]
        %1471 = vst [vmem:[%s1468] sm:$0xff] %v1466
        %1472 = vst [vmem:[%s1468 + $0x8] sm:$0xff] %v1467
        %1473 = vrot.lane.b32.xlu0 %v1466, 2
        %v1474 = vpop.permute.xlu0 %1473
        %1475 = vrot.lane.b32.xlu0 %v1467, 2
        %v1476 = vpop.permute.xlu0 %1475
        %1477 = vrot.lane.b32.xlu0 %v1469, 2
        %v1478 = vpop.permute.xlu0 %1477
        %1479 = vrot.lane.b32.xlu0 %v1470, 2
        %v1480 = vpop.permute.xlu0 %1479
        %v1481 = vsel %vm603, %v1474, %v1478
        %v1482 = vsel %vm603, %v1476, %v1480
        %s1483 = scalar_lea.vmem %s4, 96
        %v1484 = vld [vmem:[%s1483] sm:$0xff]
        %v1485 = vld [vmem:[%s1483 + $0x8] sm:$0xff]
        %v1486 = vld [vmem:[%s1483 + $0x10] sm:$0xff]
        %v1487 = vld [vmem:[%s1483 + $0x18] sm:$0xff]
        %s1488 = scalar_lea.vmem %s5, 96
        %v1489 = vld [vmem:[%s1488] sm:$0xff]
        %v1490 = vld [vmem:[%s1488 + $0x8] sm:$0xff]
        %v1491 = vld [vmem:[%s1488 + $0x10] sm:$0xff]
        %v1492 = vld [vmem:[%s1488 + $0x18] sm:$0xff]
        %1494 = vset.pattern.permute.xlu0 0
        %1495 = vperm.xlu0 %1494, %v1489
        %v1496 = vpop.permute.xlu0 %1495
        %1499 = vset.pattern.permute.xlu0 0
        %1500 = vperm.xlu0 %1499, %v1490
        %v1501 = vpop.permute.xlu0 %1500
        %1504 = vset.pattern.permute.xlu0 0
        %1505 = vperm.xlu0 %1504, %v1491
        %v1506 = vpop.permute.xlu0 %1505
        %1509 = vset.pattern.permute.xlu0 0
        %1510 = vperm.xlu0 %1509, %v1492
        %v1511 = vpop.permute.xlu0 %1510
        %v1514 = vsel %vm646, %v1484, 0
        %v1517 = vsel %vm646, %v1485, 0
        %v1520 = vsel %vm646, %v1486, 0
        %v1523 = vsel %vm646, %v1487, 0
        %1525 = vmatprep.subr.mxu0 0.0
        %1526 = vmatpush1.msra.mxu0 %v1466
        %1527 = vmatprep.subr.mxu0 0.0
        %1528 = vmatpush1.msra.mxu0 %v1467
        %1529 = vmatprep.subr.mxu0 0.0
        %1530 = vmatpush1.msra.mxu0 %v1481
        %1531 = vmatprep.subr.mxu0 0.0
        %1532 = vmatpush1.msra.mxu0 %v1482
        %1533 = vmatprep.subr.mxu0 0.0
        %1534 = vmatpush1.msra.mxu0 %v595
        %1535 = vmatprep.subr.mxu0 0.0
        %1536 = vmatpush1.msra.mxu0 0.0
        %1537 = vmatprep.subr.mxu0 0.0
        %1538 = vmatpush1.msra.mxu0 0.0
        %1539 = vmatprep.subr.mxu0 0.0
        %1540 = vmatpush1.msra.mxu0 0.0
        %1541 = vmatprep.subr.mxu0 0.0
        %1542 = vmatpush1.msra.mxu0 0.0
        %1543 = vmatprep.subr.mxu0 0.0
        %1544 = vmatpush1.msra.mxu0 0.0
        %1545 = vmatprep.subr.mxu0 0.0
        %1546 = vmatpush1.msra.mxu0 0.0
        %1547 = vmatprep.subr.mxu0 0.0
        %1548 = vmatpush1.msra.mxu0 0.0
        %1549 = vmatprep.subr.mxu0 0.0
        %1550 = vmatpush1.msra.mxu0 0.0
        %1551 = vmatprep.subr.mxu0 0.0
        %1552 = vmatpush1.msra.mxu0 0.0
        %1553 = vmatprep.subr.mxu0 0.0
        %1554 = vmatpush1.msra.mxu0 0.0
        %1555 = vmatprep.subr.mxu0 0.0
        %1556 = vmatpush1.msra.mxu0 0.0
        %1557 = vmatprep.subr.mxu0 0.0
        %1558 = vmatpush1.msra.mxu0 0.0
        %1559 = vmatprep.subr.mxu0 0.0
        %1560 = vmatpush1.msra.mxu0 0.0
        %1561 = vmatprep.subr.mxu0 0.0
        %1562 = vmatpush1.msra.mxu0 0.0
        %1563 = vmatprep.subr.mxu0 0.0
        %1564 = vmatpush1.msra.mxu0 0.0
        %1565 = vmatprep.subr.mxu0 0.0
        %1566 = vmatpush1.msra.mxu0 0.0
        %1567 = vmatprep.subr.mxu0 0.0
        %1568 = vmatpush1.msra.mxu0 0.0
        %1569 = vmatprep.subr.mxu0 0.0
        %1570 = vmatpush1.msra.mxu0 0.0
        %1571 = vmatprep.subr.mxu0 0.0
        %1572 = vmatpush1.msra.mxu0 0.0
        %1573 = vmatprep.subr.mxu0 0.0
        %1574 = vmatpush1.msra.mxu0 0.0
        %1575 = vmatprep.subr.mxu0 0.0
        %1576 = vmatpush1.msra.mxu0 0.0
        %1577 = vmatprep.subr.mxu0 0.0
        %1578 = vmatpush1.msra.mxu0 0.0
        %1579 = vmatprep.subr.mxu0 0.0
        %1580 = vmatpush1.msra.mxu0 0.0
        %1581 = vmatprep.subr.mxu0 0.0
        %1582 = vmatpush1.msra.mxu0 0.0
        %1583 = vmatprep.subr.mxu0 0.0
        %1584 = vmatpush1.msra.mxu0 0.0
        %1585 = vmatprep.subr.mxu0 0.0
        %1586 = vmatpush1.msra.mxu0 0.0
        %1587 = vmatprep.subr.mxu0 0.0
        %1588 = vmatpush1.msra.mxu0 0.0
        %1589 = vmatprep.mubr.f32.mxu0 0.0
        %1590 = vmatmul.mubr.f32.gmra.mrb[0].mxu0 %v1514
        %v1591 = vpop.f32.mrb[0].mxu0
        %v1592 = vadd.f32 %v1496, %v1591
        %v1593 = vpop.f32.mrb[0].mxu0
        %1594 = vmatprep.mubr.f32.mxu0 0.0
        %1595 = vmatmul.mubr.f32.gmra.mrb[0].mxu0 %v1517
        %v1596 = vpop.f32.mrb[0].mxu0
        %v1597 = vadd.f32 %v1501, %v1596
        %v1598 = vpop.f32.mrb[0].mxu0
        %1599 = vmatprep.mubr.f32.mxu0 0.0
        %1600 = vmatmul.mubr.f32.gmra.mrb[0].mxu0 %v1520
        %v1601 = vpop.f32.mrb[0].mxu0
        %v1602 = vadd.f32 %v1506, %v1601
        %v1603 = vpop.f32.mrb[0].mxu0
        %1604 = vmatprep.mubr.f32.mxu0 0.0
        %1605 = vmatmul.mubr.f32.gmra.mrb[0].mxu0 %v1523
        %v1606 = vpop.f32.mrb[0].mxu0
        %v1607 = vadd.f32 %v1511, %v1606
        %v1608 = vpop.f32.mrb[0].mxu0
        %1609 = vdwg.mxu0
        %v1610 = vtanh.pop %v1592
        %v1611 = vtanh.pop %v1597
        %v1612 = vxor.u32 %v1602, 2147483648
        %v1613 = vxor.u32 %v1607, 2147483648
        %v1614 = vmul.f32 %v1612, 1.442695
        %v1615 = vpow.pop %v1614
        %v1616 = vmul.f32 %v1613, 1.442695
        %v1617 = vpow.pop %v1616
        %v1618 = vadd.f32 %v1615, 1.0
        %v1619 = vadd.f32 %v1617, 1.0
        %v1620 = vrcp.pop %v1618
        %v1621 = vmul.f32 1.0, %v1620
        %v1622 = vrcp.pop %v1619
        %v1623 = vmul.f32 1.0, %v1622
        %v1624 = vmul.f32 %v1610, %v1621
        %v1625 = vmul.f32 %v1611, %v1623
        %s1626 = scalar_lea.vmem %s6, 96
        %v1627 = vld [vmem:[%s1626] sm:$0xff]
        %v1628 = vld [vmem:[%s1626 + $0x8] sm:$0xff]
        %v1629 = vld [vmem:[%s1626 + $0x10] sm:$0xff]
        %v1630 = vld [vmem:[%s1626 + $0x18] sm:$0xff]
        %s1631 = scalar_lea.vmem %s7, 96
        %v1632 = vld [vmem:[%s1631] sm:$0xff]
        %v1633 = vld [vmem:[%s1631 + $0x8] sm:$0xff]
        %v1634 = vld [vmem:[%s1631 + $0x10] sm:$0xff]
        %v1635 = vld [vmem:[%s1631 + $0x18] sm:$0xff]
        %1637 = vset.pattern.permute.xlu0 0
        %1638 = vperm.xlu0 %1637, %v1632
        %v1639 = vpop.permute.xlu0 %1638
        %1642 = vset.pattern.permute.xlu0 0
        %1643 = vperm.xlu0 %1642, %v1633
        %v1644 = vpop.permute.xlu0 %1643
        %1647 = vset.pattern.permute.xlu0 0
        %1648 = vperm.xlu0 %1647, %v1634
        %v1649 = vpop.permute.xlu0 %1648
        %1651 = vset.pattern.permute.xlu0 0
        %1652 = vperm.xlu0 %1651, %v1635
        %v1653 = vpop.permute.xlu0 %1652
        %v1655 = vsel %vm788, %v1627, 0
        %v1658 = vsel %vm788, %v1628, 0
        %v1661 = vsel %vm788, %v1629, 0
        %v1664 = vsel %vm788, %v1630, 0
        %1666 = vmatprep.subr.mxu0 0.0
        %1667 = vmatpush1.msra.mxu0 %v1624
        %1668 = vmatprep.subr.mxu0 0.0
        %1669 = vmatpush1.msra.mxu0 %v1625
        %1670 = vmatprep.subr.mxu0 0.0
        %1671 = vmatpush1.msra.mxu0 0.0
        %1672 = vmatprep.subr.mxu0 0.0
        %1673 = vmatpush1.msra.mxu0 0.0
        %1674 = vmatprep.subr.mxu0 0.0
        %1675 = vmatpush1.msra.mxu0 0.0
        %1676 = vmatprep.subr.mxu0 0.0
        %1677 = vmatpush1.msra.mxu0 0.0
        %1678 = vmatprep.subr.mxu0 0.0
        %1679 = vmatpush1.msra.mxu0 0.0
        %1680 = vmatprep.subr.mxu0 0.0
        %1681 = vmatpush1.msra.mxu0 0.0
        %1682 = vmatprep.subr.mxu0 0.0
        %1683 = vmatpush1.msra.mxu0 0.0
        %1684 = vmatprep.subr.mxu0 0.0
        %1685 = vmatpush1.msra.mxu0 0.0
        %1686 = vmatprep.subr.mxu0 0.0
        %1687 = vmatpush1.msra.mxu0 0.0
        %1688 = vmatprep.subr.mxu0 0.0
        %1689 = vmatpush1.msra.mxu0 0.0
        %1690 = vmatprep.subr.mxu0 0.0
        %1691 = vmatpush1.msra.mxu0 0.0
        %1692 = vmatprep.subr.mxu0 0.0
        %1693 = vmatpush1.msra.mxu0 0.0
        %1694 = vmatprep.subr.mxu0 0.0
        %1695 = vmatpush1.msra.mxu0 0.0
        %1696 = vmatprep.subr.mxu0 0.0
        %1697 = vmatpush1.msra.mxu0 0.0
        %1698 = vmatprep.subr.mxu0 0.0
        %1699 = vmatpush1.msra.mxu0 0.0
        %1700 = vmatprep.subr.mxu0 0.0
        %1701 = vmatpush1.msra.mxu0 0.0
        %1702 = vmatprep.subr.mxu0 0.0
        %1703 = vmatpush1.msra.mxu0 0.0
        %1704 = vmatprep.subr.mxu0 0.0
        %1705 = vmatpush1.msra.mxu0 0.0
        %1706 = vmatprep.subr.mxu0 0.0
        %1707 = vmatpush1.msra.mxu0 0.0
        %1708 = vmatprep.subr.mxu0 0.0
        %1709 = vmatpush1.msra.mxu0 0.0
        %1710 = vmatprep.subr.mxu0 0.0
        %1711 = vmatpush1.msra.mxu0 0.0
        %1712 = vmatprep.subr.mxu0 0.0
        %1713 = vmatpush1.msra.mxu0 0.0
        %1714 = vmatprep.subr.mxu0 0.0
        %1715 = vmatpush1.msra.mxu0 0.0
        %1716 = vmatprep.subr.mxu0 0.0
        %1717 = vmatpush1.msra.mxu0 0.0
        %1718 = vmatprep.subr.mxu0 0.0
        %1719 = vmatpush1.msra.mxu0 0.0
        %1720 = vmatprep.subr.mxu0 0.0
        %1721 = vmatpush1.msra.mxu0 0.0
        %1722 = vmatprep.subr.mxu0 0.0
        %1723 = vmatpush1.msra.mxu0 0.0
        %1724 = vmatprep.subr.mxu0 0.0
        %1725 = vmatpush1.msra.mxu0 0.0
        %1726 = vmatprep.subr.mxu0 0.0
        %1727 = vmatpush1.msra.mxu0 0.0
        %1728 = vmatprep.subr.mxu0 0.0
        %1729 = vmatpush1.msra.mxu0 0.0
        %1730 = vmatprep.mubr.f32.mxu0 0.0
        %1731 = vmatmul.mubr.f32.gmra.mrb[0].mxu0 %v1655
        %v1732 = vpop.f32.mrb[0].mxu0
        %v1733 = vadd.f32 %v1639, %v1732
        %v1734 = vpop.f32.mrb[0].mxu0
        %1735 = vmatprep.mubr.f32.mxu0 0.0
        %1736 = vmatmul.mubr.f32.gmra.mrb[0].mxu0 %v1658
        %v1737 = vpop.f32.mrb[0].mxu0
        %v1738 = vadd.f32 %v1644, %v1737
        %v1739 = vpop.f32.mrb[0].mxu0
        %1740 = vmatprep.mubr.f32.mxu0 0.0
        %1741 = vmatmul.mubr.f32.gmra.mrb[0].mxu0 %v1661
        %v1742 = vpop.f32.mrb[0].mxu0
        %v1743 = vpop.f32.mrb[0].mxu0
        %1744 = vmatprep.mubr.f32.mxu0 0.0
        %1745 = vmatmul.mubr.f32.gmra.mrb[0].mxu0 %v1664
        %v1746 = vpop.f32.mrb[0].mxu0
        %v1747 = vpop.f32.mrb[0].mxu0
        %1748 = vdwg.mxu0
        %v1749 = vadd.f32 %v1464, %v1733
        %v1750 = vadd.f32 %v1465, %v1738
        %v1751 = vmax.f32 %v1749, 0.0
        %v1752 = vmax.f32 %v1750, 0.0
        %v1753 = vld [vmem:[%s8] sm:$0xff]
        %v1754 = vld [vmem:[%s8 + $0x8] sm:$0xff]
        %v1755 = vld [vmem:[%s9] sm:$0xff]
        %v1756 = vld [vmem:[%s9 + $0x8] sm:$0xff]
        %1758 = vset.pattern.permute.xlu0 0
        %1759 = vperm.xlu0 %1758, %v1755
        %v1760 = vpop.permute.xlu0 %1759
        %1763 = vset.pattern.permute.xlu0 0
        %1764 = vperm.xlu0 %1763, %v1756
        %v1765 = vpop.permute.xlu0 %1764
        %v1768 = vsel %vm788, %v1753, 0
        %v1771 = vsel %vm788, %v1754, 0
        %1773 = vmatprep.subr.mxu0 0.0
        %1774 = vmatpush1.msra.mxu0 %v1751
        %1775 = vmatprep.subr.mxu0 0.0
        %1776 = vmatpush1.msra.mxu0 %v1752
        %1777 = vmatprep.subr.mxu0 0.0
        %1778 = vmatpush1.msra.mxu0 0.0
        %1779 = vmatprep.subr.mxu0 0.0
        %1780 = vmatpush1.msra.mxu0 0.0
        %1781 = vmatprep.subr.mxu0 0.0
        %1782 = vmatpush1.msra.mxu0 0.0
        %1783 = vmatprep.subr.mxu0 0.0
        %1784 = vmatpush1.msra.mxu0 0.0
        %1785 = vmatprep.subr.mxu0 0.0
        %1786 = vmatpush1.msra.mxu0 0.0
        %1787 = vmatprep.subr.mxu0 0.0
        %1788 = vmatpush1.msra.mxu0 0.0
        %1789 = vmatprep.subr.mxu0 0.0
        %1790 = vmatpush1.msra.mxu0 0.0
        %1791 = vmatprep.subr.mxu0 0.0
        %1792 = vmatpush1.msra.mxu0 0.0
        %1793 = vmatprep.subr.mxu0 0.0
        %1794 = vmatpush1.msra.mxu0 0.0
        %1795 = vmatprep.subr.mxu0 0.0
        %1796 = vmatpush1.msra.mxu0 0.0
        %1797 = vmatprep.subr.mxu0 0.0
        %1798 = vmatpush1.msra.mxu0 0.0
        %1799 = vmatprep.subr.mxu0 0.0
        %1800 = vmatpush1.msra.mxu0 0.0
        %1801 = vmatprep.subr.mxu0 0.0
        %1802 = vmatpush1.msra.mxu0 0.0
        %1803 = vmatprep.subr.mxu0 0.0
        %1804 = vmatpush1.msra.mxu0 0.0
        %1805 = vmatprep.subr.mxu0 0.0
        %1806 = vmatpush1.msra.mxu0 0.0
        %1807 = vmatprep.subr.mxu0 0.0
        %1808 = vmatpush1.msra.mxu0 0.0
        %1809 = vmatprep.subr.mxu0 0.0
        %1810 = vmatpush1.msra.mxu0 0.0
        %1811 = vmatprep.subr.mxu0 0.0
        %1812 = vmatpush1.msra.mxu0 0.0
        %1813 = vmatprep.subr.mxu0 0.0
        %1814 = vmatpush1.msra.mxu0 0.0
        %1815 = vmatprep.subr.mxu0 0.0
        %1816 = vmatpush1.msra.mxu0 0.0
        %1817 = vmatprep.subr.mxu0 0.0
        %1818 = vmatpush1.msra.mxu0 0.0
        %1819 = vmatprep.subr.mxu0 0.0
        %1820 = vmatpush1.msra.mxu0 0.0
        %1821 = vmatprep.subr.mxu0 0.0
        %1822 = vmatpush1.msra.mxu0 0.0
        %1823 = vmatprep.subr.mxu0 0.0
        %1824 = vmatpush1.msra.mxu0 0.0
        %1825 = vmatprep.subr.mxu0 0.0
        %1826 = vmatpush1.msra.mxu0 0.0
        %1827 = vmatprep.subr.mxu0 0.0
        %1828 = vmatpush1.msra.mxu0 0.0
        %1829 = vmatprep.subr.mxu0 0.0
        %1830 = vmatpush1.msra.mxu0 0.0
        %1831 = vmatprep.subr.mxu0 0.0
        %1832 = vmatpush1.msra.mxu0 0.0
        %1833 = vmatprep.subr.mxu0 0.0
        %1834 = vmatpush1.msra.mxu0 0.0
        %1835 = vmatprep.subr.mxu0 0.0
        %1836 = vmatpush1.msra.mxu0 0.0
        %1837 = vmatprep.mubr.f32.mxu0 0.0
        %1838 = vmatmul.mubr.f32.gmra.mrb[0].mxu0 %v1768
        %v1839 = vpop.f32.mrb[0].mxu0
        %v1840 = vadd.f32 %v1760, %v1839
        %v1841 = vpop.f32.mrb[0].mxu0
        %1842 = vmatprep.mubr.f32.mxu0 0.0
        %1843 = vmatmul.mubr.f32.gmra.mrb[0].mxu0 %v1771
        %v1844 = vpop.f32.mrb[0].mxu0
        %v1845 = vadd.f32 %v1765, %v1844
        %v1846 = vpop.f32.mrb[0].mxu0
        %1847 = vdwg.mxu0
        %v1848 = vmax.f32 %v1840, 0.0
        %v1849 = vmax.f32 %v1845, 0.0
        %v1850 = vld [vmem:[%s10] sm:$0xff]
        %v1851 = vld [vmem:[%s10 + $0x8] sm:$0xff]
        %v1852 = vld [vmem:[%s10 + $0x10] sm:$0xff]
        %v1853 = vld [vmem:[%s10 + $0x18] sm:$0xff]
        %v1854 = vld [vmem:[%s11] sm:$0xff]
        %v1855 = vld [vmem:[%s11 + $0x8] sm:$0xff]
        %v1856 = vld [vmem:[%s11 + $0x10] sm:$0xff]
        %v1857 = vld [vmem:[%s11 + $0x18] sm:$0xff]
        %1859 = vset.pattern.permute.xlu0 0
        %1860 = vperm.xlu0 %1859, %v1854
        %v1861 = vpop.permute.xlu0 %1860
        %1864 = vset.pattern.permute.xlu0 0
        %1865 = vperm.xlu0 %1864, %v1855
        %v1866 = vpop.permute.xlu0 %1865
        %1869 = vset.pattern.permute.xlu0 0
        %1870 = vperm.xlu0 %1869, %v1856
        %v1871 = vpop.permute.xlu0 %1870
        %1874 = vset.pattern.permute.xlu0 0
        %1875 = vperm.xlu0 %1874, %v1857
        %v1876 = vpop.permute.xlu0 %1875
        %v1879 = vsel %vm788, %v1850, 0
        %v1882 = vsel %vm788, %v1851, 0
        %v1885 = vsel %vm788, %v1852, 0
        %v1888 = vsel %vm788, %v1853, 0
        %1890 = vmatprep.subr.mxu0 0.0
        %1891 = vmatpush1.msra.mxu0 %v1848
        %1892 = vmatprep.subr.mxu0 0.0
        %1893 = vmatpush1.msra.mxu0 %v1849
        %1894 = vmatprep.subr.mxu0 0.0
        %1895 = vmatpush1.msra.mxu0 0.0
        %1896 = vmatprep.subr.mxu0 0.0
        %1897 = vmatpush1.msra.mxu0 0.0
        %1898 = vmatprep.subr.mxu0 0.0
        %1899 = vmatpush1.msra.mxu0 0.0
        %1900 = vmatprep.subr.mxu0 0.0
        %1901 = vmatpush1.msra.mxu0 0.0
        %1902 = vmatprep.subr.mxu0 0.0
        %1903 = vmatpush1.msra.mxu0 0.0
        %1904 = vmatprep.subr.mxu0 0.0
        %1905 = vmatpush1.msra.mxu0 0.0
        %1906 = vmatprep.subr.mxu0 0.0
        %1907 = vmatpush1.msra.mxu0 0.0
        %1908 = vmatprep.subr.mxu0 0.0
        %1909 = vmatpush1.msra.mxu0 0.0
        %1910 = vmatprep.subr.mxu0 0.0
        %1911 = vmatpush1.msra.mxu0 0.0
        %1912 = vmatprep.subr.mxu0 0.0
        %1913 = vmatpush1.msra.mxu0 0.0
        %1914 = vmatprep.subr.mxu0 0.0
        %1915 = vmatpush1.msra.mxu0 0.0
        %1916 = vmatprep.subr.mxu0 0.0
        %1917 = vmatpush1.msra.mxu0 0.0
        %1918 = vmatprep.subr.mxu0 0.0
        %1919 = vmatpush1.msra.mxu0 0.0
        %1920 = vmatprep.subr.mxu0 0.0
        %1921 = vmatpush1.msra.mxu0 0.0
        %1922 = vmatprep.subr.mxu0 0.0
        %1923 = vmatpush1.msra.mxu0 0.0
        %1924 = vmatprep.subr.mxu0 0.0
        %1925 = vmatpush1.msra.mxu0 0.0
        %1926 = vmatprep.subr.mxu0 0.0
        %1927 = vmatpush1.msra.mxu0 0.0
        %1928 = vmatprep.subr.mxu0 0.0
        %1929 = vmatpush1.msra.mxu0 0.0
        %1930 = vmatprep.subr.mxu0 0.0
        %1931 = vmatpush1.msra.mxu0 0.0
        %1932 = vmatprep.subr.mxu0 0.0
        %1933 = vmatpush1.msra.mxu0 0.0
        %1934 = vmatprep.subr.mxu0 0.0
        %1935 = vmatpush1.msra.mxu0 0.0
        %1936 = vmatprep.subr.mxu0 0.0
        %1937 = vmatpush1.msra.mxu0 0.0
        %1938 = vmatprep.subr.mxu0 0.0
        %1939 = vmatpush1.msra.mxu0 0.0
        %1940 = vmatprep.subr.mxu0 0.0
        %1941 = vmatpush1.msra.mxu0 0.0
        %1942 = vmatprep.subr.mxu0 0.0
        %1943 = vmatpush1.msra.mxu0 0.0
        %1944 = vmatprep.subr.mxu0 0.0
        %1945 = vmatpush1.msra.mxu0 0.0
        %1946 = vmatprep.subr.mxu0 0.0
        %1947 = vmatpush1.msra.mxu0 0.0
        %1948 = vmatprep.subr.mxu0 0.0
        %1949 = vmatpush1.msra.mxu0 0.0
        %1950 = vmatprep.subr.mxu0 0.0
        %1951 = vmatpush1.msra.mxu0 0.0
        %1952 = vmatprep.subr.mxu0 0.0
        %1953 = vmatpush1.msra.mxu0 0.0
        %1954 = vmatprep.mubr.f32.mxu0 0.0
        %1955 = vmatmul.mubr.f32.gmra.mrb[0].mxu0 %v1879
        %v1956 = vpop.f32.mrb[0].mxu0
        %v1957 = vadd.f32 %v1861, %v1956
        %v1958 = vpop.f32.mrb[0].mxu0
        %1959 = vmatprep.mubr.f32.mxu0 0.0
        %1960 = vmatmul.mubr.f32.gmra.mrb[0].mxu0 %v1882
        %v1961 = vpop.f32.mrb[0].mxu0
        %v1962 = vadd.f32 %v1866, %v1961
        %v1963 = vpop.f32.mrb[0].mxu0
        %1964 = vmatprep.mubr.f32.mxu0 0.0
        %1965 = vmatmul.mubr.f32.gmra.mrb[0].mxu0 %v1885
        %v1966 = vpop.f32.mrb[0].mxu0
        %v1967 = vadd.f32 %v1871, %v1966
        %v1968 = vpop.f32.mrb[0].mxu0
        %1969 = vmatprep.mubr.f32.mxu0 0.0
        %1970 = vmatmul.mubr.f32.gmra.mrb[0].mxu0 %v1888
        %v1971 = vpop.f32.mrb[0].mxu0
        %v1972 = vadd.f32 %v1876, %v1971
        %v1973 = vpop.f32.mrb[0].mxu0
        %1974 = vdwg.mxu0
        %1975 = vst [vmem:[%s449] sm:$0xff] %v1957
        %1976 = vst [vmem:[%s449 + $0x8] sm:$0xff] %v1962
        %1977 = vst [vmem:[%s449 + $0x10] sm:$0xff] %v1967
        %1978 = vst [vmem:[%s449 + $0x18] sm:$0xff] %v1972
        %s1979 = sand.u32 %s314, 1
        %s1980 = scalar_lea.sflag [#allocation4], %s1979
        %s1981 = sand.u32 %s314, 1
        %s1982 = smul.addr %s1981, 32
        %s1983 = scalar_lea.vmem [#allocation3], %s1982
        // Predicated region
        $region73: #{tpu_custom_call.1} parent=67 // pred_check
          %p1984 = pneg %p324
        $region74: #{tpu_custom_call.1} parent=67 // pred_check_branch
          %1986 = sbr.rel (%p1984) target = $region76
        $region75: #{tpu_custom_call.1} parent=67 // pred_region
          %s1988 = ssub.s32 512, 512
          %1989 = vsyncadd %s1980, %s1988
          %s1990 = smul.addr %s30, 8
          %s1991 = sadd.s32 %s31, %s1990
          %s1992 = smul.addr %s1991, 128
          %s1993 = scalar_lea.hbm %s12, %s1992
          %s1994 = sshll.u32 %s1983, 4
          %s1995 = int_to_ptr.vmem [resolvable:$true] %s1994
          %2000 = dma.vmem_to_hbm [thread:$0]  %s1995, 512, %s1993, %s1980, 128, 256, 8
        $region76: #{tpu_custom_call.1} parent=67 // pred_fallthru
          _
      $region68: #{tpu_custom_call.1} parent=5 // pred_fallthru
        _
      %p2001 = scmp.le.s32.totalorder 2, %s21
      // Predicated region
      $region77: #{tpu_custom_call.1} parent=5 // pred_check
        %p2002 = pneg %p2001
      $region78: #{tpu_custom_call.1} parent=5 // pred_check_branch
        %2004 = sbr.rel (%p2002) target = $region80
      $region79: #{tpu_custom_call.1} parent=5 // pred_region
        %s2005 = ssub.s32 %s21, 2
        // Predicated region
        $region81: #{tpu_custom_call.1} parent=79 // pred_check
          %p2006 = pneg %p330
        $region82: #{tpu_custom_call.1} parent=79 // pred_check_branch
          %2008 = sbr.rel (%p2006) target = $region84
        $region83: #{tpu_custom_call.1} parent=79 // pred_region
          %s2009 = sand.u32 %s315, 1
          %s2010 = scalar_lea.sflag [#allocation4], %s2009
          %s2011 = sand.u32 %s315, 1
          %s2012 = smul.addr %s2011, 32
          %s2013 = scalar_lea.vmem [#allocation3], %s2012
          %2014 = dma.done %s2010, 512
        $region84: #{tpu_custom_call.1} parent=79 // pred_fallthru
          _
      $region80: #{tpu_custom_call.1} parent=5 // pred_fallthru
        _
    $region6: #{tpu_custom_call.1} parent=1 // loop_footer
      %s25 = sadd.s32 1, %s21
    $region7: #{tpu_custom_call.1} parent=1 // loop_footer_branch
      %20 = sbr.rel target = $region3
    $region8: #{tpu_custom_call.1} parent=1 // loop_exit
      _
    %2015 = vsyncpa [#allocation4], 1
    %s2016 = scalar_lea.sflag [#allocation4], 1
    %2017 = vsyncpa %s2016, 1

</llo_original>
